<compile_context>
chip_gen: v7x
topology: tpu7x:2x2x1
jax: 0.10.0
libtpu: 0.0.40
codegen_flags: <defaults>
</compile_context>

<pallas_src>
import functools
import math

import jax
import jax.numpy as jnp
from jax.experimental import pallas as pl
from jax.experimental.pallas import tpu as pltpu


# ----------------------------- helpers -----------------------------

def _layernorm(x, g, b, eps):
    """LayerNorm over the last axis, f32 statistics."""
    mu = jnp.mean(x, axis=-1, keepdims=True)
    var = jnp.mean(jnp.square(x - mu), axis=-1, keepdims=True)
    return (x - mu) * jax.lax.rsqrt(var + eps) * g + b


# ----------------------------- fused Pallas kernel -----------------------------

def _fused_kernel(x_emb_ref, mask_ref, ex_ref, eg_ref, eb_ref,
                  wqkv_ref, bqkv_ref, wo_ref, bo_ref, ln1g_ref, ln1b_ref,
                  w1_ref, b1_ref, w2_ref, b2_ref, ln2g_ref, ln2b_ref,
                  pw_ref, pb_ref, wh_ref, we_ref, fcb_ref,
                  logits_ref,
                  x_sc,
                  *, B, S, nh, hd, L, eps):
    """grid=(L,): one step per transformer layer; hidden state carried in x_sc.

    Last step also runs the fused pooler + classifier epilogue.
    """
    l = pl.program_id(0)

    # Step 0: embedding LayerNorm (no zero-residual materialization).
    @pl.when(l == 0)
    def _():
        x_sc[...] = _layernorm(x_emb_ref[...], eg_ref[...], eb_ref[...], eps)
        logits_ref[...] = jnp.zeros_like(logits_ref)

    x = x_sc[...]                                               # (T, H) f32

    # ---- self-attention: packed QKV matmul (bf16 operands, f32 accumulate) ----
    # wqkv columns are head-major: [h0:(q,k,v), h1:(q,k,v), ...]; the attention
    # scale 1/sqrt(hd) is already folded into the Q columns / Q bias.
    qkv = jnp.dot(x.astype(jnp.bfloat16), wqkv_ref[0],
                  preferred_element_type=jnp.float32) + bqkv_ref[0]   # (T, 3H)
    wo = wo_ref[0]                                              # (H, H) bf16
    mask = mask_ref[...]                                        # (B, S) additive

    # Per-(batch, head) attention; each head's context goes straight through its
    # slice of the output projection and is accumulated in registers (no ctx
    # scratch, no lane-masked partial stores).
    # TODO(synk): switch to lax.fori_loop(..., unroll=True) over b*nh once B/nh
    #             grow beyond the toy config (bound vreg live ranges).
    per_batch = []
    for b in range(B):
        rows = slice(b * S, (b + 1) * S)
        m_row = mask[b:b + 1, :]                                # (1, S)
        acc = None
        for h in range(nh):
            base = h * 3 * hd
            qh = qkv[rows, base:base + hd].astype(jnp.bfloat16)
            kh = qkv[rows, base + hd:base + 2 * hd].astype(jnp.bfloat16)
            vh = qkv[rows, base + 2 * hd:base + 3 * hd].astype(jnp.bfloat16)
            s = jax.lax.dot_general(qh, kh, (((1,), (1,)), ((), ())),
                                    preferred_element_type=jnp.float32)
            s = s + m_row                                       # scale pre-folded
            s = s - jnp.max(s, axis=-1, keepdims=True)
            p = jnp.exp(s)
            p = p * pl.reciprocal(jnp.sum(p, axis=-1, keepdims=True), approx=True)
            ctx = jnp.dot(p.astype(jnp.bfloat16), vh,
                          preferred_element_type=jnp.float32)   # (S, hd)
            contrib = jnp.dot(ctx.astype(jnp.bfloat16), wo[h * hd:(h + 1) * hd, :],
                              preferred_element_type=jnp.float32)   # (S, H)
            acc = contrib if acc is None else acc + contrib
        per_batch.append(acc)
    attn_out = jnp.concatenate(per_batch, axis=0) + bo_ref[0]   # (T, H)

    x = _layernorm(x + attn_out, ln1g_ref[0], ln1b_ref[0], eps)

    # ---- feed-forward (tanh-approx GELU: EUP slot instead of erf polynomial) ----
    mid = jnp.dot(x.astype(jnp.bfloat16), w1_ref[0],
                  preferred_element_type=jnp.float32) + b1_ref[0]
    mid = 0.5 * mid * (1.0 + jnp.tanh(0.7978845608028654 *
                                      (mid + 0.044715 * mid * mid * mid)))
    ffn_out = jnp.dot(mid.astype(jnp.bfloat16), w2_ref[0],
                      preferred_element_type=jnp.float32) + b2_ref[0]
    x = _layernorm(x + ffn_out, ln2g_ref[0], ln2b_ref[0], eps)

    x_sc[...] = x                                               # layer carry (VMEM)

    # ---- fused pooler + classifier epilogue on the last layer step ----
    @pl.when(l == L - 1)
    def _():
        # CLS rows (first token of each sequence) from the in-register hidden state.
        x0 = jnp.concatenate([x[b * S:b * S + 1, :] for b in range(B)], axis=0)
        pooled = jnp.tanh(jnp.dot(x0.astype(jnp.bfloat16), pw_ref[...],
                                  preferred_element_type=jnp.float32) + pb_ref[...])
        # Dropout(p=0.5) == identity in eval mode.
        # concat([pooled, extra]) @ W == pooled @ W_h + extra * W_e   (extra size 1)
        y = jnp.dot(pooled.astype(jnp.bfloat16), wh_ref[...],
                    preferred_element_type=jnp.float32)
        logits_ref[...] = y + ex_ref[...] * we_ref[...] + fcb_ref[...]   # (B, NP)


# ----------------------------- model config / params -----------------------------

CFG = dict(vocab=100, max_pos=16, type_vocab=2, hidden=32,
           layers=2, heads=2, head_dim=16, intermediate=64,
           extra_feature_size=1, num_classes=2, pad_classes=128)


def init_params(key, cfg):
    H, I, L = cfg["hidden"], cfg["intermediate"], cfg["layers"]
    nh, hd = cfg["heads"], cfg["head_dim"]
    NC, NP = cfg["num_classes"], cfg["pad_classes"]
    keys = iter(jax.random.split(key, 40))
    scale = 1.0 / math.sqrt(hd)

    def rnd(shape):
        return 0.02 * jax.random.normal(next(keys), shape, jnp.float32)

    # QKV packed head-major (per head: q, k, v contiguous); fold 1/sqrt(hd) into Q.
    wqkv = rnd((L, H, nh, 3, hd)).at[:, :, :, 0, :].multiply(scale)
    bqkv = rnd((L, nh, 3, hd)).at[:, :, 0, :].multiply(scale)
    wqkv = wqkv.reshape(L, H, 3 * H).astype(jnp.bfloat16)
    bqkv = bqkv.reshape(L, 1, 3 * H)

    # classifier weights padded to a lane-dense (·, 128) slab (zeros beyond NC)
    fc_wh = jnp.zeros((H, NP), jnp.float32).at[:, :NC].set(rnd((H, NC)))
    fc_we = jnp.zeros((1, NP), jnp.float32).at[:, :NC].set(rnd((1, NC)))

    return dict(
        tok_emb=rnd((cfg["vocab"], H)),
        pos_emb=rnd((cfg["max_pos"], H)),
        type_emb=rnd((cfg["type_vocab"], H)),
        emb_ln_g=jnp.ones((1, H), jnp.float32),
        emb_ln_b=jnp.zeros((1, H), jnp.float32),
        wqkv=wqkv, bqkv=bqkv,
        wo=rnd((L, H, H)).astype(jnp.bfloat16), bo=jnp.zeros((L, 1, H), jnp.float32),
        ln1_g=jnp.ones((L, 1, H), jnp.float32), ln1_b=jnp.zeros((L, 1, H), jnp.float32),
        w1=rnd((L, H, I)).astype(jnp.bfloat16), b1=jnp.zeros((L, 1, I), jnp.float32),
        w2=rnd((L, I, H)).astype(jnp.bfloat16), b2=jnp.zeros((L, 1, H), jnp.float32),
        ln2_g=jnp.ones((L, 1, H), jnp.float32), ln2_b=jnp.zeros((L, 1, H), jnp.float32),
        pool_w=rnd((H, H)).astype(jnp.bfloat16), pool_b=jnp.zeros((1, H), jnp.float32),
        fc_wh=fc_wh.astype(jnp.bfloat16), fc_we=fc_we, fc_b=jnp.zeros((1, NP), jnp.float32),
    )


# ----------------------------- forward pass -----------------------------

def bert_with_extra_feature(params, input_ids, attention_mask, extra_feature, cfg=CFG):
    B, S = input_ids.shape
    H, nh, hd, I, L = (cfg["hidden"], cfg["heads"], cfg["head_dim"],
                       cfg["intermediate"], cfg["layers"])
    NC, NP = cfg["num_classes"], cfg["pad_classes"]
    T = B * S

    # --- embeddings (gather = glue; LayerNorm happens inside the kernel) ---
    tok = jnp.take(params["tok_emb"], input_ids, axis=0)        # (B, S, H)
    pos = params["pos_emb"][:S][None, :, :]                     # (1, S, H)
    seg = params["type_emb"][0][None, None, :]                  # token_type_ids = 0
    x_emb = (tok + pos + seg).astype(jnp.float32).reshape(T, H)

    # additive attention mask, built once: 0 where attended, -1e4 where masked
    mask_add = (1.0 - attention_mask.astype(jnp.float32)) * -10000.0   # (B, S)

    kernel = functools.partial(_fused_kernel, B=B, S=S, nh=nh, hd=hd, L=L, eps=1e-12)

    # --- full encoder + pooler + classifier in ONE pallas_call, grid over layers ---
    logits_pad = pl.pallas_call(
        kernel,
        grid=(L,),
        out_shape=jax.ShapeDtypeStruct((B, NP), jnp.float32),
        in_specs=[
            pl.BlockSpec((T, H), lambda l: (0, 0)),             # x_emb
            pl.BlockSpec((B, S), lambda l: (0, 0)),             # mask_add
            pl.BlockSpec((B, 1), lambda l: (0, 0)),             # extra feature
            pl.BlockSpec((1, H), lambda l: (0, 0)),             # emb_ln_g
            pl.BlockSpec((1, H), lambda l: (0, 0)),             # emb_ln_b
            pl.BlockSpec((1, H, 3 * H), lambda l: (l, 0, 0)),   # wqkv
            pl.BlockSpec((1, 1, 3 * H), lambda l: (l, 0, 0)),   # bqkv
            pl.BlockSpec((1, H, H), lambda l: (l, 0, 0)),       # wo
            pl.BlockSpec((1, 1, H), lambda l: (l, 0, 0)),       # bo
            pl.BlockSpec((1, 1, H), lambda l: (l, 0, 0)),       # ln1_g
            pl.BlockSpec((1, 1, H), lambda l: (l, 0, 0)),       # ln1_b
            pl.BlockSpec((1, H, I), lambda l: (l, 0, 0)),       # w1
            pl.BlockSpec((1, 1, I), lambda l: (l, 0, 0)),       # b1
            pl.BlockSpec((1, I, H), lambda l: (l, 0, 0)),       # w2
            pl.BlockSpec((1, 1, H), lambda l: (l, 0, 0)),       # b2
            pl.BlockSpec((1, 1, H), lambda l: (l, 0, 0)),       # ln2_g
            pl.BlockSpec((1, 1, H), lambda l: (l, 0, 0)),       # ln2_b
            pl.BlockSpec((H, H), lambda l: (0, 0)),             # pool_w
            pl.BlockSpec((1, H), lambda l: (0, 0)),             # pool_b
            pl.BlockSpec((H, NP), lambda l: (0, 0)),            # fc_wh (padded)
            pl.BlockSpec((1, NP), lambda l: (0, 0)),            # fc_we (padded)
            pl.BlockSpec((1, NP), lambda l: (0, 0)),            # fc_b  (padded)
        ],
        out_specs=pl.BlockSpec((B, NP), lambda l: (0, 0)),      # lane-dense logits
        scratch_shapes=[pltpu.VMEM((T, H), jnp.float32)],       # carried hidden state
        compiler_params=pltpu.CompilerParams(
            dimension_semantics=("arbitrary",)),
    )(x_emb, mask_add, extra_feature.astype(jnp.float32),
      params["emb_ln_g"], params["emb_ln_b"],
      params["wqkv"], params["bqkv"], params["wo"], params["bo"],
      params["ln1_g"], params["ln1_b"], params["w1"], params["b1"],
      params["w2"], params["b2"], params["ln2_g"], params["ln2_b"],
      params["pool_w"], params["pool_b"],
      params["fc_wh"], params["fc_we"], params["fc_b"])

    return logits_pad[:, :NC]                                   # (B, 2)


# ----------------------------- main -----------------------------

if __name__ == "__main__":
    key = jax.random.PRNGKey(0)
    k_param, k_ids, k_extra = jax.random.split(key, 3)

    B, S = 2, 8
    params = init_params(k_param, CFG)

    input_ids = jax.random.randint(k_ids, (B, S), 0, CFG["vocab"], dtype=jnp.int32)
    attention_mask = jnp.concatenate(
        [jnp.ones((B, S - 2), jnp.int32), jnp.zeros((B, 2), jnp.int32)], axis=1)
    extra_feature = jax.random.normal(k_extra, (B, 1), dtype=jnp.float32)

    fwd = jax.jit(bert_with_extra_feature)
    logits = fwd(params, input_ids, attention_mask, extra_feature)
    jax.block_until_ready(logits)

    assert logits.shape == (B, CFG["num_classes"]) and logits.dtype == jnp.float32
    assert bool(jnp.all(jnp.isfinite(logits)))
    print("KERNEL_OK")
</pallas_src>

<mosaic_0001>
module attributes {stable_mosaic.version = 11 : i64} {
  func.func @_fused_kernel(%arg0: i32, %arg1: memref<16x32xf32, #tpu.memory_space<vmem>>, %arg2: memref<2x8xf32, #tpu.memory_space<vmem>>, %arg3: memref<2x1xf32, #tpu.memory_space<vmem>>, %arg4: memref<1x32xf32, #tpu.memory_space<vmem>>, %arg5: memref<1x32xf32, #tpu.memory_space<vmem>>, %arg6: memref<1x32x96xbf16, #tpu.memory_space<vmem>>, %arg7: memref<1x1x96xf32, #tpu.memory_space<vmem>>, %arg8: memref<1x32x32xbf16, #tpu.memory_space<vmem>>, %arg9: memref<1x1x32xf32, #tpu.memory_space<vmem>>, %arg10: memref<1x1x32xf32, #tpu.memory_space<vmem>>, %arg11: memref<1x1x32xf32, #tpu.memory_space<vmem>>, %arg12: memref<1x32x64xbf16, #tpu.memory_space<vmem>>, %arg13: memref<1x1x64xf32, #tpu.memory_space<vmem>>, %arg14: memref<1x64x32xbf16, #tpu.memory_space<vmem>>, %arg15: memref<1x1x32xf32, #tpu.memory_space<vmem>>, %arg16: memref<1x1x32xf32, #tpu.memory_space<vmem>>, %arg17: memref<1x1x32xf32, #tpu.memory_space<vmem>>, %arg18: memref<32x32xbf16, #tpu.memory_space<vmem>>, %arg19: memref<1x32xf32, #tpu.memory_space<vmem>>, %arg20: memref<32x128xbf16, #tpu.memory_space<vmem>>, %arg21: memref<1x128xf32, #tpu.memory_space<vmem>>, %arg22: memref<1x128xf32, #tpu.memory_space<vmem>>, %arg23: memref<2x128xf32, #tpu.memory_space<vmem>>, %arg24: memref<16x32xf32, #tpu.memory_space<vmem>>) attributes {dimension_semantics = [#tpu.dimension_semantics<arbitrary>], iteration_bounds = array<i64: 2>, scalar_prefetch = 0 : i64, scratch_operands = 1 : i64, tpu.core_type = #tpu.core_type<tc>, window_params = [{pipeline_mode = #tpu.pipeline_mode<synchronous>, transform_indices = @transform_0, window_bounds = array<i64: 16, 32>}, {pipeline_mode = #tpu.pipeline_mode<synchronous>, transform_indices = @transform_1, window_bounds = array<i64: 2, 8>}, {pipeline_mode = #tpu.pipeline_mode<synchronous>, transform_indices = @transform_2, window_bounds = array<i64: 2, 1>}, {pipeline_mode = #tpu.pipeline_mode<synchronous>, transform_indices = @transform_3, window_bounds = array<i64: 1, 32>}, {pipeline_mode = #tpu.pipeline_mode<synchronous>, transform_indices = @transform_4, window_bounds = array<i64: 1, 32>}, {transform_indices = @transform_5, window_bounds = array<i64: 1, 32, 96>}, {transform_indices = @transform_6, window_bounds = array<i64: 1, 1, 96>}, {transform_indices = @transform_7, window_bounds = array<i64: 1, 32, 32>}, {transform_indices = @transform_8, window_bounds = array<i64: 1, 1, 32>}, {transform_indices = @transform_9, window_bounds = array<i64: 1, 1, 32>}, {transform_indices = @transform_10, window_bounds = array<i64: 1, 1, 32>}, {transform_indices = @transform_11, window_bounds = array<i64: 1, 32, 64>}, {transform_indices = @transform_12, window_bounds = array<i64: 1, 1, 64>}, {transform_indices = @transform_13, window_bounds = array<i64: 1, 64, 32>}, {transform_indices = @transform_14, window_bounds = array<i64: 1, 1, 32>}, {transform_indices = @transform_15, window_bounds = array<i64: 1, 1, 32>}, {transform_indices = @transform_16, window_bounds = array<i64: 1, 1, 32>}, {pipeline_mode = #tpu.pipeline_mode<synchronous>, transform_indices = @transform_17, window_bounds = array<i64: 32, 32>}, {pipeline_mode = #tpu.pipeline_mode<synchronous>, transform_indices = @transform_18, window_bounds = array<i64: 1, 32>}, {pipeline_mode = #tpu.pipeline_mode<synchronous>, transform_indices = @transform_19, window_bounds = array<i64: 32, 128>}, {pipeline_mode = #tpu.pipeline_mode<synchronous>, transform_indices = @transform_20, window_bounds = array<i64: 1, 128>}, {pipeline_mode = #tpu.pipeline_mode<synchronous>, transform_indices = @transform_21, window_bounds = array<i64: 1, 128>}, {pipeline_mode = #tpu.pipeline_mode<synchronous>, transform_indices = @transform_22, window_bounds = array<i64: 2, 128>}]} {
    %c0_i32 = arith.constant 0 : i32
    %0 = arith.cmpi eq, %arg0, %c0_i32 : i32
    %1 = arith.extui %0 : i1 to i32
    %c0_i32_0 = arith.constant 0 : i32
    %2 = arith.cmpi ne, %1, %c0_i32_0 : i32
    scf.if %2 {
      %c0_79 = arith.constant 0 : index
      %c0_80 = arith.constant 0 : index
      %207 = vector.load %arg1[%c0_79, %c0_80] : memref<16x32xf32, #tpu.memory_space<vmem>>, vector<16x32xf32>
      %c0_81 = arith.constant 0 : index
      %c0_82 = arith.constant 0 : index
      %208 = vector.load %arg4[%c0_81, %c0_82] : memref<1x32xf32, #tpu.memory_space<vmem>>, vector<1x32xf32>
      %c0_83 = arith.constant 0 : index
      %c0_84 = arith.constant 0 : index
      %209 = vector.load %arg5[%c0_83, %c0_84] : memref<1x32xf32, #tpu.memory_space<vmem>>, vector<1x32xf32>
      %cst_85 = arith.constant dense<0.000000e+00> : vector<16xf32>
      %210 = vector.multi_reduction <add>, %207, %cst_85 [1] : vector<16x32xf32> to vector<16xf32>
      %211 = vector.shape_cast %210 : vector<16xf32> to vector<16x1xf32>
      %cst_86 = arith.constant 3.200000e+01 : f32
      %212 = vector.broadcast %cst_86 : f32 to vector<16x1xf32>
      %213 = arith.divf %211, %212 : vector<16x1xf32>
      %214 = vector.broadcast %213 : vector<16x1xf32> to vector<16x32xf32>
      %215 = arith.subf %207, %214 : vector<16x32xf32>
      %216 = arith.mulf %215, %215 : vector<16x32xf32>
      %cst_87 = arith.constant dense<0.000000e+00> : vector<16xf32>
      %217 = vector.multi_reduction <add>, %216, %cst_87 [1] : vector<16x32xf32> to vector<16xf32>
      %218 = vector.shape_cast %217 : vector<16xf32> to vector<16x1xf32>
      %cst_88 = arith.constant 3.200000e+01 : f32
      %219 = vector.broadcast %cst_88 : f32 to vector<16x1xf32>
      %220 = arith.divf %218, %219 : vector<16x1xf32>
      %221 = vector.broadcast %213 : vector<16x1xf32> to vector<16x32xf32>
      %222 = arith.subf %207, %221 : vector<16x32xf32>
      %cst_89 = arith.constant 9.99999996E-13 : f32
      %223 = vector.broadcast %cst_89 : f32 to vector<16x1xf32>
      %224 = arith.addf %220, %223 : vector<16x1xf32>
      %225 = math.rsqrt %224 : vector<16x1xf32>
      %226 = vector.broadcast %225 : vector<16x1xf32> to vector<16x32xf32>
      %227 = arith.mulf %222, %226 : vector<16x32xf32>
      %228 = vector.broadcast %208 : vector<1x32xf32> to vector<16x32xf32>
      %229 = arith.mulf %227, %228 : vector<16x32xf32>
      %230 = vector.broadcast %209 : vector<1x32xf32> to vector<16x32xf32>
      %231 = arith.addf %229, %230 : vector<16x32xf32>
      %c0_90 = arith.constant 0 : index
      %c0_91 = arith.constant 0 : index
      %232 = vector.load %arg24[%c0_90, %c0_91] : memref<16x32xf32, #tpu.memory_space<vmem>>, vector<16x32xf32>
      tpu.vector_store %arg24[%c0_90, %c0_91], %231 {strides = array<i32>} : memref<16x32xf32, #tpu.memory_space<vmem>>, vector<16x32xf32>,
      %cst_92 = arith.constant 0.000000e+00 : f32
      %233 = vector.broadcast %cst_92 : f32 to vector<2x128xf32>
      %c0_93 = arith.constant 0 : index
      %c0_94 = arith.constant 0 : index
      %234 = vector.load %arg23[%c0_93, %c0_94] : memref<2x128xf32, #tpu.memory_space<vmem>>, vector<2x128xf32>
      tpu.vector_store %arg23[%c0_93, %c0_94], %233 {strides = array<i32>} : memref<2x128xf32, #tpu.memory_space<vmem>>, vector<2x128xf32>,
    } else {
    }
    %c0 = arith.constant 0 : index
    %c0_1 = arith.constant 0 : index
    %3 = vector.load %arg24[%c0, %c0_1] : memref<16x32xf32, #tpu.memory_space<vmem>>, vector<16x32xf32>
    %4 = arith.truncf %3 : vector<16x32xf32> to vector<16x32xbf16>
    %c0_2 = arith.constant 0 : index
    %c0_3 = arith.constant 0 : index
    %c0_4 = arith.constant 0 : index
    %5 = vector.load %arg6[%c0_2, %c0_3, %c0_4] : memref<1x32x96xbf16, #tpu.memory_space<vmem>>, vector<1x32x96xbf16>
    %6 = vector.shape_cast %5 : vector<1x32x96xbf16> to vector<32x96xbf16>
    %cst = arith.constant dense<0.000000e+00> : vector<16x96xf32>
    %7 = tpu.matmul %4, %6, %cst {dimension_numbers = #tpu.dot_dimension_numbers<[1], [0], [0], [1], [0, 0, 1, 1], [], []>} : vector<16x32xbf16>, vector<32x96xbf16>, vector<16x96xf32> -> vector<16x96xf32>
    %c0_5 = arith.constant 0 : index
    %c0_6 = arith.constant 0 : index
    %c0_7 = arith.constant 0 : index
    %8 = vector.load %arg7[%c0_5, %c0_6, %c0_7] : memref<1x1x96xf32, #tpu.memory_space<vmem>>, vector<1x1x96xf32>
    %9 = vector.shape_cast %8 : vector<1x1x96xf32> to vector<1x96xf32>
    %10 = vector.broadcast %9 : vector<1x96xf32> to vector<16x96xf32>
    %11 = arith.addf %7, %10 : vector<16x96xf32>
    %c0_8 = arith.constant 0 : index
    %c0_9 = arith.constant 0 : index
    %c0_10 = arith.constant 0 : index
    %12 = vector.load %arg8[%c0_8, %c0_9, %c0_10] : memref<1x32x32xbf16, #tpu.memory_space<vmem>>, vector<1x32x32xbf16>
    %13 = vector.shape_cast %12 : vector<1x32x32xbf16> to vector<32x32xbf16>
    %c0_11 = arith.constant 0 : index
    %c0_12 = arith.constant 0 : index
    %14 = vector.load %arg2[%c0_11, %c0_12] : memref<2x8xf32, #tpu.memory_space<vmem>>, vector<2x8xf32>
    %15 = vector.extract_strided_slice %14 {offsets = [0, 0], sizes = [1, 8], strides = [1, 1]} : vector<2x8xf32> to vector<1x8xf32>
    %16 = vector.extract_strided_slice %11 {offsets = [0, 0], sizes = [8, 16], strides = [1, 1]} : vector<16x96xf32> to vector<8x16xf32>
    %17 = arith.truncf %16 : vector<8x16xf32> to vector<8x16xbf16>
    %18 = vector.extract_strided_slice %11 {offsets = [0, 16], sizes = [8, 16], strides = [1, 1]} : vector<16x96xf32> to vector<8x16xf32>
    %19 = arith.truncf %18 : vector<8x16xf32> to vector<8x16xbf16>
    %20 = vector.extract_strided_slice %11 {offsets = [0, 32], sizes = [8, 16], strides = [1, 1]} : vector<16x96xf32> to vector<8x16xf32>
    %21 = arith.truncf %20 : vector<8x16xf32> to vector<8x16xbf16>
    %cst_13 = arith.constant dense<0.000000e+00> : vector<8x8xf32>
    %22 = tpu.matmul %17, %19, %cst_13 {dimension_numbers = #tpu.dot_dimension_numbers<[1], [1], [0], [0], [0, 0, 1, 0], [], []>} : vector<8x16xbf16>, vector<8x16xbf16>, vector<8x8xf32> -> vector<8x8xf32>
    %23 = vector.broadcast %15 : vector<1x8xf32> to vector<8x8xf32>
    %24 = arith.addf %22, %23 : vector<8x8xf32>
    %cst_14 = arith.constant dense<0xFF800000> : vector<8xf32>
    %25 = vector.multi_reduction <maximumf>, %24, %cst_14 [1] : vector<8x8xf32> to vector<8xf32>
    %26 = vector.shape_cast %25 : vector<8xf32> to vector<8x1xf32>
    %27 = vector.broadcast %26 : vector<8x1xf32> to vector<8x8xf32>
    %28 = arith.subf %24, %27 : vector<8x8xf32>
    %29 = math.exp %28 : vector<8x8xf32>
    %cst_15 = arith.constant dense<0.000000e+00> : vector<8xf32>
    %30 = vector.multi_reduction <add>, %29, %cst_15 [1] : vector<8x8xf32> to vector<8xf32>
    %31 = vector.shape_cast %30 : vector<8xf32> to vector<8x1xf32>
    %32 = tpu.reciprocal %31 {approx = true} : vector<8x1xf32> -> vector<8x1xf32>
    %33 = vector.broadcast %32 : vector<8x1xf32> to vector<8x8xf32>
    %34 = arith.mulf %29, %33 : vector<8x8xf32>
    %35 = arith.truncf %34 : vector<8x8xf32> to vector<8x8xbf16>
    %cst_16 = arith.constant dense<0.000000e+00> : vector<8x16xf32>
    %36 = tpu.matmul %35, %21, %cst_16 {dimension_numbers = #tpu.dot_dimension_numbers<[1], [0], [0], [1], [0, 0, 1, 1], [], []>} : vector<8x8xbf16>, vector<8x16xbf16>, vector<8x16xf32> -> vector<8x16xf32>
    %37 = arith.truncf %36 : vector<8x16xf32> to vector<8x16xbf16>
    %38 = vector.extract_strided_slice %13 {offsets = [0, 0], sizes = [16, 32], strides = [1, 1]} : vector<32x32xbf16> to vector<16x32xbf16>
    %cst_17 = arith.constant dense<0.000000e+00> : vector<8x32xf32>
    %39 = tpu.matmul %37, %38, %cst_17 {dimension_numbers = #tpu.dot_dimension_numbers<[1], [0], [0], [1], [0, 0, 1, 1], [], []>} : vector<8x16xbf16>, vector<16x32xbf16>, vector<8x32xf32> -> vector<8x32xf32>
    %40 = vector.extract_strided_slice %11 {offsets = [0, 48], sizes = [8, 16], strides = [1, 1]} : vector<16x96xf32> to vector<8x16xf32>
    %41 = arith.truncf %40 : vector<8x16xf32> to vector<8x16xbf16>
    %42 = vector.extract_strided_slice %11 {offsets = [0, 64], sizes = [8, 16], strides = [1, 1]} : vector<16x96xf32> to vector<8x16xf32>
    %43 = arith.truncf %42 : vector<8x16xf32> to vector<8x16xbf16>
    %44 = vector.extract_strided_slice %11 {offsets = [0, 80], sizes = [8, 16], strides = [1, 1]} : vector<16x96xf32> to vector<8x16xf32>
    %45 = arith.truncf %44 : vector<8x16xf32> to vector<8x16xbf16>
    %cst_18 = arith.constant dense<0.000000e+00> : vector<8x8xf32>
    %46 = tpu.matmul %41, %43, %cst_18 {dimension_numbers = #tpu.dot_dimension_numbers<[1], [1], [0], [0], [0, 0, 1, 0], [], []>} : vector<8x16xbf16>, vector<8x16xbf16>, vector<8x8xf32> -> vector<8x8xf32>
    %47 = vector.broadcast %15 : vector<1x8xf32> to vector<8x8xf32>
    %48 = arith.addf %46, %47 : vector<8x8xf32>
    %cst_19 = arith.constant dense<0xFF800000> : vector<8xf32>
    %49 = vector.multi_reduction <maximumf>, %48, %cst_19 [1] : vector<8x8xf32> to vector<8xf32>
    %50 = vector.shape_cast %49 : vector<8xf32> to vector<8x1xf32>
    %51 = vector.broadcast %50 : vector<8x1xf32> to vector<8x8xf32>
    %52 = arith.subf %48, %51 : vector<8x8xf32>
    %53 = math.exp %52 : vector<8x8xf32>
    %cst_20 = arith.constant dense<0.000000e+00> : vector<8xf32>
    %54 = vector.multi_reduction <add>, %53, %cst_20 [1] : vector<8x8xf32> to vector<8xf32>
    %55 = vector.shape_cast %54 : vector<8xf32> to vector<8x1xf32>
    %56 = tpu.reciprocal %55 {approx = true} : vector<8x1xf32> -> vector<8x1xf32>
    %57 = vector.broadcast %56 : vector<8x1xf32> to vector<8x8xf32>
    %58 = arith.mulf %53, %57 : vector<8x8xf32>
    %59 = arith.truncf %58 : vector<8x8xf32> to vector<8x8xbf16>
    %cst_21 = arith.constant dense<0.000000e+00> : vector<8x16xf32>
    %60 = tpu.matmul %59, %45, %cst_21 {dimension_numbers = #tpu.dot_dimension_numbers<[1], [0], [0], [1], [0, 0, 1, 1], [], []>} : vector<8x8xbf16>, vector<8x16xbf16>, vector<8x16xf32> -> vector<8x16xf32>
    %61 = arith.truncf %60 : vector<8x16xf32> to vector<8x16xbf16>
    %62 = vector.extract_strided_slice %13 {offsets = [16, 0], sizes = [16, 32], strides = [1, 1]} : vector<32x32xbf16> to vector<16x32xbf16>
    %cst_22 = arith.constant dense<0.000000e+00> : vector<8x32xf32>
    %63 = tpu.matmul %61, %62, %cst_22 {dimension_numbers = #tpu.dot_dimension_numbers<[1], [0], [0], [1], [0, 0, 1, 1], [], []>} : vector<8x16xbf16>, vector<16x32xbf16>, vector<8x32xf32> -> vector<8x32xf32>
    %64 = arith.addf %39, %63 : vector<8x32xf32>
    %65 = vector.extract_strided_slice %14 {offsets = [1, 0], sizes = [1, 8], strides = [1, 1]} : vector<2x8xf32> to vector<1x8xf32>
    %66 = vector.extract_strided_slice %11 {offsets = [8, 0], sizes = [8, 16], strides = [1, 1]} : vector<16x96xf32> to vector<8x16xf32>
    %67 = arith.truncf %66 : vector<8x16xf32> to vector<8x16xbf16>
    %68 = vector.extract_strided_slice %11 {offsets = [8, 16], sizes = [8, 16], strides = [1, 1]} : vector<16x96xf32> to vector<8x16xf32>
    %69 = arith.truncf %68 : vector<8x16xf32> to vector<8x16xbf16>
    %70 = vector.extract_strided_slice %11 {offsets = [8, 32], sizes = [8, 16], strides = [1, 1]} : vector<16x96xf32> to vector<8x16xf32>
    %71 = arith.truncf %70 : vector<8x16xf32> to vector<8x16xbf16>
    %cst_23 = arith.constant dense<0.000000e+00> : vector<8x8xf32>
    %72 = tpu.matmul %67, %69, %cst_23 {dimension_numbers = #tpu.dot_dimension_numbers<[1], [1], [0], [0], [0, 0, 1, 0], [], []>} : vector<8x16xbf16>, vector<8x16xbf16>, vector<8x8xf32> -> vector<8x8xf32>
    %73 = vector.broadcast %65 : vector<1x8xf32> to vector<8x8xf32>
    %74 = arith.addf %72, %73 : vector<8x8xf32>
    %cst_24 = arith.constant dense<0xFF800000> : vector<8xf32>
    %75 = vector.multi_reduction <maximumf>, %74, %cst_24 [1] : vector<8x8xf32> to vector<8xf32>
    %76 = vector.shape_cast %75 : vector<8xf32> to vector<8x1xf32>
    %77 = vector.broadcast %76 : vector<8x1xf32> to vector<8x8xf32>
    %78 = arith.subf %74, %77 : vector<8x8xf32>
    %79 = math.exp %78 : vector<8x8xf32>
    %cst_25 = arith.constant dense<0.000000e+00> : vector<8xf32>
    %80 = vector.multi_reduction <add>, %79, %cst_25 [1] : vector<8x8xf32> to vector<8xf32>
    %81 = vector.shape_cast %80 : vector<8xf32> to vector<8x1xf32>
    %82 = tpu.reciprocal %81 {approx = true} : vector<8x1xf32> -> vector<8x1xf32>
    %83 = vector.broadcast %82 : vector<8x1xf32> to vector<8x8xf32>
    %84 = arith.mulf %79, %83 : vector<8x8xf32>
    %85 = arith.truncf %84 : vector<8x8xf32> to vector<8x8xbf16>
    %cst_26 = arith.constant dense<0.000000e+00> : vector<8x16xf32>
    %86 = tpu.matmul %85, %71, %cst_26 {dimension_numbers = #tpu.dot_dimension_numbers<[1], [0], [0], [1], [0, 0, 1, 1], [], []>} : vector<8x8xbf16>, vector<8x16xbf16>, vector<8x16xf32> -> vector<8x16xf32>
    %87 = arith.truncf %86 : vector<8x16xf32> to vector<8x16xbf16>
    %88 = vector.extract_strided_slice %13 {offsets = [0, 0], sizes = [16, 32], strides = [1, 1]} : vector<32x32xbf16> to vector<16x32xbf16>
    %cst_27 = arith.constant dense<0.000000e+00> : vector<8x32xf32>
    %89 = tpu.matmul %87, %88, %cst_27 {dimension_numbers = #tpu.dot_dimension_numbers<[1], [0], [0], [1], [0, 0, 1, 1], [], []>} : vector<8x16xbf16>, vector<16x32xbf16>, vector<8x32xf32> -> vector<8x32xf32>
    %90 = vector.extract_strided_slice %11 {offsets = [8, 48], sizes = [8, 16], strides = [1, 1]} : vector<16x96xf32> to vector<8x16xf32>
    %91 = arith.truncf %90 : vector<8x16xf32> to vector<8x16xbf16>
    %92 = vector.extract_strided_slice %11 {offsets = [8, 64], sizes = [8, 16], strides = [1, 1]} : vector<16x96xf32> to vector<8x16xf32>
    %93 = arith.truncf %92 : vector<8x16xf32> to vector<8x16xbf16>
    %94 = vector.extract_strided_slice %11 {offsets = [8, 80], sizes = [8, 16], strides = [1, 1]} : vector<16x96xf32> to vector<8x16xf32>
    %95 = arith.truncf %94 : vector<8x16xf32> to vector<8x16xbf16>
    %cst_28 = arith.constant dense<0.000000e+00> : vector<8x8xf32>
    %96 = tpu.matmul %91, %93, %cst_28 {dimension_numbers = #tpu.dot_dimension_numbers<[1], [1], [0], [0], [0, 0, 1, 0], [], []>} : vector<8x16xbf16>, vector<8x16xbf16>, vector<8x8xf32> -> vector<8x8xf32>
    %97 = vector.broadcast %65 : vector<1x8xf32> to vector<8x8xf32>
    %98 = arith.addf %96, %97 : vector<8x8xf32>
    %cst_29 = arith.constant dense<0xFF800000> : vector<8xf32>
    %99 = vector.multi_reduction <maximumf>, %98, %cst_29 [1] : vector<8x8xf32> to vector<8xf32>
    %100 = vector.shape_cast %99 : vector<8xf32> to vector<8x1xf32>
    %101 = vector.broadcast %100 : vector<8x1xf32> to vector<8x8xf32>
    %102 = arith.subf %98, %101 : vector<8x8xf32>
    %103 = math.exp %102 : vector<8x8xf32>
    %cst_30 = arith.constant dense<0.000000e+00> : vector<8xf32>
    %104 = vector.multi_reduction <add>, %103, %cst_30 [1] : vector<8x8xf32> to vector<8xf32>
    %105 = vector.shape_cast %104 : vector<8xf32> to vector<8x1xf32>
    %106 = tpu.reciprocal %105 {approx = true} : vector<8x1xf32> -> vector<8x1xf32>
    %107 = vector.broadcast %106 : vector<8x1xf32> to vector<8x8xf32>
    %108 = arith.mulf %103, %107 : vector<8x8xf32>
    %109 = arith.truncf %108 : vector<8x8xf32> to vector<8x8xbf16>
    %cst_31 = arith.constant dense<0.000000e+00> : vector<8x16xf32>
    %110 = tpu.matmul %109, %95, %cst_31 {dimension_numbers = #tpu.dot_dimension_numbers<[1], [0], [0], [1], [0, 0, 1, 1], [], []>} : vector<8x8xbf16>, vector<8x16xbf16>, vector<8x16xf32> -> vector<8x16xf32>
    %111 = arith.truncf %110 : vector<8x16xf32> to vector<8x16xbf16>
    %112 = vector.extract_strided_slice %13 {offsets = [16, 0], sizes = [16, 32], strides = [1, 1]} : vector<32x32xbf16> to vector<16x32xbf16>
    %cst_32 = arith.constant dense<0.000000e+00> : vector<8x32xf32>
    %113 = tpu.matmul %111, %112, %cst_32 {dimension_numbers = #tpu.dot_dimension_numbers<[1], [0], [0], [1], [0, 0, 1, 1], [], []>} : vector<8x16xbf16>, vector<16x32xbf16>, vector<8x32xf32> -> vector<8x32xf32>
    %114 = arith.addf %89, %113 : vector<8x32xf32>
    %115 = tpu.concatenate %64, %114 in 0 : vector<8x32xf32>, vector<8x32xf32> -> vector<16x32xf32>
    %c0_33 = arith.constant 0 : index
    %c0_34 = arith.constant 0 : index
    %c0_35 = arith.constant 0 : index
    %116 = vector.load %arg9[%c0_33, %c0_34, %c0_35] : memref<1x1x32xf32, #tpu.memory_space<vmem>>, vector<1x1x32xf32>
    %117 = vector.shape_cast %116 : vector<1x1x32xf32> to vector<1x32xf32>
    %118 = vector.broadcast %117 : vector<1x32xf32> to vector<16x32xf32>
    %119 = arith.addf %115, %118 : vector<16x32xf32>
    %120 = arith.addf %3, %119 : vector<16x32xf32>
    %c0_36 = arith.constant 0 : index
    %c0_37 = arith.constant 0 : index
    %c0_38 = arith.constant 0 : index
    %121 = vector.load %arg10[%c0_36, %c0_37, %c0_38] : memref<1x1x32xf32, #tpu.memory_space<vmem>>, vector<1x1x32xf32>
    %122 = vector.shape_cast %121 : vector<1x1x32xf32> to vector<1x32xf32>
    %c0_39 = arith.constant 0 : index
    %c0_40 = arith.constant 0 : index
    %c0_41 = arith.constant 0 : index
    %123 = vector.load %arg11[%c0_39, %c0_40, %c0_41] : memref<1x1x32xf32, #tpu.memory_space<vmem>>, vector<1x1x32xf32>
    %124 = vector.shape_cast %123 : vector<1x1x32xf32> to vector<1x32xf32>
    %cst_42 = arith.constant dense<0.000000e+00> : vector<16xf32>
    %125 = vector.multi_reduction <add>, %120, %cst_42 [1] : vector<16x32xf32> to vector<16xf32>
    %126 = vector.shape_cast %125 : vector<16xf32> to vector<16x1xf32>
    %cst_43 = arith.constant 3.200000e+01 : f32
    %127 = vector.broadcast %cst_43 : f32 to vector<16x1xf32>
    %128 = arith.divf %126, %127 : vector<16x1xf32>
    %129 = vector.broadcast %128 : vector<16x1xf32> to vector<16x32xf32>
    %130 = arith.subf %120, %129 : vector<16x32xf32>
    %131 = arith.mulf %130, %130 : vector<16x32xf32>
    %cst_44 = arith.constant dense<0.000000e+00> : vector<16xf32>
    %132 = vector.multi_reduction <add>, %131, %cst_44 [1] : vector<16x32xf32> to vector<16xf32>
    %133 = vector.shape_cast %132 : vector<16xf32> to vector<16x1xf32>
    %cst_45 = arith.constant 3.200000e+01 : f32
    %134 = vector.broadcast %cst_45 : f32 to vector<16x1xf32>
    %135 = arith.divf %133, %134 : vector<16x1xf32>
    %136 = vector.broadcast %128 : vector<16x1xf32> to vector<16x32xf32>
    %137 = arith.subf %120, %136 : vector<16x32xf32>
    %cst_46 = arith.constant 9.99999996E-13 : f32
    %138 = vector.broadcast %cst_46 : f32 to vector<16x1xf32>
    %139 = arith.addf %135, %138 : vector<16x1xf32>
    %140 = math.rsqrt %139 : vector<16x1xf32>
    %141 = vector.broadcast %140 : vector<16x1xf32> to vector<16x32xf32>
    %142 = arith.mulf %137, %141 : vector<16x32xf32>
    %143 = vector.broadcast %122 : vector<1x32xf32> to vector<16x32xf32>
    %144 = arith.mulf %142, %143 : vector<16x32xf32>
    %145 = vector.broadcast %124 : vector<1x32xf32> to vector<16x32xf32>
    %146 = arith.addf %144, %145 : vector<16x32xf32>
    %147 = arith.truncf %146 : vector<16x32xf32> to vector<16x32xbf16>
    %c0_47 = arith.constant 0 : index
    %c0_48 = arith.constant 0 : index
    %c0_49 = arith.constant 0 : index
    %148 = vector.load %arg12[%c0_47, %c0_48, %c0_49] : memref<1x32x64xbf16, #tpu.memory_space<vmem>>, vector<1x32x64xbf16>
    %149 = vector.shape_cast %148 : vector<1x32x64xbf16> to vector<32x64xbf16>
    %cst_50 = arith.constant dense<0.000000e+00> : vector<16x64xf32>
    %150 = tpu.matmul %147, %149, %cst_50 {dimension_numbers = #tpu.dot_dimension_numbers<[1], [0], [0], [1], [0, 0, 1, 1], [], []>} : vector<16x32xbf16>, vector<32x64xbf16>, vector<16x64xf32> -> vector<16x64xf32>
    %c0_51 = arith.constant 0 : index
    %c0_52 = arith.constant 0 : index
    %c0_53 = arith.constant 0 : index
    %151 = vector.load %arg13[%c0_51, %c0_52, %c0_53] : memref<1x1x64xf32, #tpu.memory_space<vmem>>, vector<1x1x64xf32>
    %152 = vector.shape_cast %151 : vector<1x1x64xf32> to vector<1x64xf32>
    %153 = vector.broadcast %152 : vector<1x64xf32> to vector<16x64xf32>
    %154 = arith.addf %150, %153 : vector<16x64xf32>
    %cst_54 = arith.constant 5.000000e-01 : f32
    %155 = vector.broadcast %cst_54 : f32 to vector<16x64xf32>
    %156 = arith.mulf %155, %154 : vector<16x64xf32>
    %cst_55 = arith.constant 4.471500e-02 : f32
    %157 = vector.broadcast %cst_55 : f32 to vector<16x64xf32>
    %158 = arith.mulf %157, %154 : vector<16x64xf32>
    %159 = arith.mulf %158, %154 : vector<16x64xf32>
    %160 = arith.mulf %159, %154 : vector<16x64xf32>
    %161 = arith.addf %154, %160 : vector<16x64xf32>
    %cst_56 = arith.constant 0.797884583 : f32
    %162 = vector.broadcast %cst_56 : f32 to vector<16x64xf32>
    %163 = arith.mulf %162, %161 : vector<16x64xf32>
    %164 = math.tanh %163 : vector<16x64xf32>
    %cst_57 = arith.constant 1.000000e+00 : f32
    %165 = vector.broadcast %cst_57 : f32 to vector<16x64xf32>
    %166 = arith.addf %165, %164 : vector<16x64xf32>
    %167 = arith.mulf %156, %166 : vector<16x64xf32>
    %168 = arith.truncf %167 : vector<16x64xf32> to vector<16x64xbf16>
    %c0_58 = arith.constant 0 : index
    %c0_59 = arith.constant 0 : index
    %c0_60 = arith.constant 0 : index
    %169 = vector.load %arg14[%c0_58, %c0_59, %c0_60] : memref<1x64x32xbf16, #tpu.memory_space<vmem>>, vector<1x64x32xbf16>
    %170 = vector.shape_cast %169 : vector<1x64x32xbf16> to vector<64x32xbf16>
    %cst_61 = arith.constant dense<0.000000e+00> : vector<16x32xf32>
    %171 = tpu.matmul %168, %170, %cst_61 {dimension_numbers = #tpu.dot_dimension_numbers<[1], [0], [0], [1], [0, 0, 1, 1], [], []>} : vector<16x64xbf16>, vector<64x32xbf16>, vector<16x32xf32> -> vector<16x32xf32>
    %c0_62 = arith.constant 0 : index
    %c0_63 = arith.constant 0 : index
    %c0_64 = arith.constant 0 : index
    %172 = vector.load %arg15[%c0_62, %c0_63, %c0_64] : memref<1x1x32xf32, #tpu.memory_space<vmem>>, vector<1x1x32xf32>
    %173 = vector.shape_cast %172 : vector<1x1x32xf32> to vector<1x32xf32>
    %174 = vector.broadcast %173 : vector<1x32xf32> to vector<16x32xf32>
    %175 = arith.addf %171, %174 : vector<16x32xf32>
    %176 = arith.addf %146, %175 : vector<16x32xf32>
    %c0_65 = arith.constant 0 : index
    %c0_66 = arith.constant 0 : index
    %c0_67 = arith.constant 0 : index
    %177 = vector.load %arg16[%c0_65, %c0_66, %c0_67] : memref<1x1x32xf32, #tpu.memory_space<vmem>>, vector<1x1x32xf32>
    %178 = vector.shape_cast %177 : vector<1x1x32xf32> to vector<1x32xf32>
    %c0_68 = arith.constant 0 : index
    %c0_69 = arith.constant 0 : index
    %c0_70 = arith.constant 0 : index
    %179 = vector.load %arg17[%c0_68, %c0_69, %c0_70] : memref<1x1x32xf32, #tpu.memory_space<vmem>>, vector<1x1x32xf32>
    %180 = vector.shape_cast %179 : vector<1x1x32xf32> to vector<1x32xf32>
    %cst_71 = arith.constant dense<0.000000e+00> : vector<16xf32>
    %181 = vector.multi_reduction <add>, %176, %cst_71 [1] : vector<16x32xf32> to vector<16xf32>
    %182 = vector.shape_cast %181 : vector<16xf32> to vector<16x1xf32>
    %cst_72 = arith.constant 3.200000e+01 : f32
    %183 = vector.broadcast %cst_72 : f32 to vector<16x1xf32>
    %184 = arith.divf %182, %183 : vector<16x1xf32>
    %185 = vector.broadcast %184 : vector<16x1xf32> to vector<16x32xf32>
    %186 = arith.subf %176, %185 : vector<16x32xf32>
    %187 = arith.mulf %186, %186 : vector<16x32xf32>
    %cst_73 = arith.constant dense<0.000000e+00> : vector<16xf32>
    %188 = vector.multi_reduction <add>, %187, %cst_73 [1] : vector<16x32xf32> to vector<16xf32>
    %189 = vector.shape_cast %188 : vector<16xf32> to vector<16x1xf32>
    %cst_74 = arith.constant 3.200000e+01 : f32
    %190 = vector.broadcast %cst_74 : f32 to vector<16x1xf32>
    %191 = arith.divf %189, %190 : vector<16x1xf32>
    %192 = vector.broadcast %184 : vector<16x1xf32> to vector<16x32xf32>
    %193 = arith.subf %176, %192 : vector<16x32xf32>
    %cst_75 = arith.constant 9.99999996E-13 : f32
    %194 = vector.broadcast %cst_75 : f32 to vector<16x1xf32>
    %195 = arith.addf %191, %194 : vector<16x1xf32>
    %196 = math.rsqrt %195 : vector<16x1xf32>
    %197 = vector.broadcast %196 : vector<16x1xf32> to vector<16x32xf32>
    %198 = arith.mulf %193, %197 : vector<16x32xf32>
    %199 = vector.broadcast %178 : vector<1x32xf32> to vector<16x32xf32>
    %200 = arith.mulf %198, %199 : vector<16x32xf32>
    %201 = vector.broadcast %180 : vector<1x32xf32> to vector<16x32xf32>
    %202 = arith.addf %200, %201 : vector<16x32xf32>
    %c0_76 = arith.constant 0 : index
    %c0_77 = arith.constant 0 : index
    %203 = vector.load %arg24[%c0_76, %c0_77] : memref<16x32xf32, #tpu.memory_space<vmem>>, vector<16x32xf32>
    tpu.vector_store %arg24[%c0_76, %c0_77], %202 {strides = array<i32>} : memref<16x32xf32, #tpu.memory_space<vmem>>, vector<16x32xf32>,
    %c1_i32 = arith.constant 1 : i32
    %204 = arith.cmpi eq, %arg0, %c1_i32 : i32
    %205 = arith.extui %204 : i1 to i32
    %c0_i32_78 = arith.constant 0 : i32
    %206 = arith.cmpi ne, %205, %c0_i32_78 : i32
    scf.if %206 {
      %207 = vector.extract_strided_slice %202 {offsets = [0, 0], sizes = [1, 32], strides = [1, 1]} : vector<16x32xf32> to vector<1x32xf32>
      %208 = vector.extract_strided_slice %202 {offsets = [8, 0], sizes = [1, 32], strides = [1, 1]} : vector<16x32xf32> to vector<1x32xf32>
      %209 = tpu.concatenate %207, %208 in 0 : vector<1x32xf32>, vector<1x32xf32> -> vector<2x32xf32>
      %210 = arith.truncf %209 : vector<2x32xf32> to vector<2x32xbf16>
      %c0_79 = arith.constant 0 : index
      %c0_80 = arith.constant 0 : index
      %211 = vector.load %arg18[%c0_79, %c0_80] : memref<32x32xbf16, #tpu.memory_space<vmem>>, vector<32x32xbf16>
      %cst_81 = arith.constant dense<0.000000e+00> : vector<2x32xf32>
      %212 = tpu.matmul %210, %211, %cst_81 {dimension_numbers = #tpu.dot_dimension_numbers<[1], [0], [0], [1], [0, 0, 1, 1], [], []>} : vector<2x32xbf16>, vector<32x32xbf16>, vector<2x32xf32> -> vector<2x32xf32>
      %c0_82 = arith.constant 0 : index
      %c0_83 = arith.constant 0 : index
      %213 = vector.load %arg19[%c0_82, %c0_83] : memref<1x32xf32, #tpu.memory_space<vmem>>, vector<1x32xf32>
      %214 = vector.broadcast %213 : vector<1x32xf32> to vector<2x32xf32>
      %215 = arith.addf %212, %214 : vector<2x32xf32>
      %216 = math.tanh %215 : vector<2x32xf32>
      %217 = arith.truncf %216 : vector<2x32xf32> to vector<2x32xbf16>
      %c0_84 = arith.constant 0 : index
      %c0_85 = arith.constant 0 : index
      %218 = vector.load %arg20[%c0_84, %c0_85] : memref<32x128xbf16, #tpu.memory_space<vmem>>, vector<32x128xbf16>
      %cst_86 = arith.constant dense<0.000000e+00> : vector<2x128xf32>
      %219 = tpu.matmul %217, %218, %cst_86 {dimension_numbers = #tpu.dot_dimension_numbers<[1], [0], [0], [1], [0, 0, 1, 1], [], []>} : vector<2x32xbf16>, vector<32x128xbf16>, vector<2x128xf32> -> vector<2x128xf32>
      %c0_87 = arith.constant 0 : index
      %c0_88 = arith.constant 0 : index
      %220 = vector.load %arg3[%c0_87, %c0_88] : memref<2x1xf32, #tpu.memory_space<vmem>>, vector<2x1xf32>
      %c0_89 = arith.constant 0 : index
      %c0_90 = arith.constant 0 : index
      %221 = vector.load %arg21[%c0_89, %c0_90] : memref<1x128xf32, #tpu.memory_space<vmem>>, vector<1x128xf32>
      %222 = vector.broadcast %220 : vector<2x1xf32> to vector<2x128xf32>
      %223 = vector.broadcast %221 : vector<1x128xf32> to vector<2x128xf32>
      %224 = arith.mulf %222, %223 : vector<2x128xf32>
      %225 = arith.addf %219, %224 : vector<2x128xf32>
      %c0_91 = arith.constant 0 : index
      %c0_92 = arith.constant 0 : index
      %226 = vector.load %arg22[%c0_91, %c0_92] : memref<1x128xf32, #tpu.memory_space<vmem>>, vector<1x128xf32>
      %227 = vector.broadcast %226 : vector<1x128xf32> to vector<2x128xf32>
      %228 = arith.addf %225, %227 : vector<2x128xf32>
      %c0_93 = arith.constant 0 : index
      %c0_94 = arith.constant 0 : index
      %229 = vector.load %arg23[%c0_93, %c0_94] : memref<2x128xf32, #tpu.memory_space<vmem>>, vector<2x128xf32>
      tpu.vector_store %arg23[%c0_93, %c0_94], %228 {strides = array<i32>} : memref<2x128xf32, #tpu.memory_space<vmem>>, vector<2x128xf32>,
    } else {
    }
    return
  }
  func.func @transform_0(%arg0: i32) -> (i32, i32) {
    %c0_i32 = arith.constant 0 : i32
    %c0_i32_0 = arith.constant 0 : i32
    %c0_i32_1 = arith.constant 0 : i32
    return %c0_i32, %c0_i32_0 : i32, i32
  }
  func.func @transform_1(%arg0: i32) -> (i32, i32) {
    %c0_i32 = arith.constant 0 : i32
    %c0_i32_0 = arith.constant 0 : i32
    %c0_i32_1 = arith.constant 0 : i32
    return %c0_i32, %c0_i32_0 : i32, i32
  }
  func.func @transform_2(%arg0: i32) -> (i32, i32) {
    %c0_i32 = arith.constant 0 : i32
    %c0_i32_0 = arith.constant 0 : i32
    %c0_i32_1 = arith.constant 0 : i32
    return %c0_i32, %c0_i32_0 : i32, i32
  }
  func.func @transform_3(%arg0: i32) -> (i32, i32) {
    %c0_i32 = arith.constant 0 : i32
    %c0_i32_0 = arith.constant 0 : i32
    %c0_i32_1 = arith.constant 0 : i32
    return %c0_i32, %c0_i32_0 : i32, i32
  }
  func.func @transform_4(%arg0: i32) -> (i32, i32) {
    %c0_i32 = arith.constant 0 : i32
    %c0_i32_0 = arith.constant 0 : i32
    %c0_i32_1 = arith.constant 0 : i32
    return %c0_i32, %c0_i32_0 : i32, i32
  }
  func.func @transform_5(%arg0: i32) -> (i32, i32, i32) {
    %c0_i32 = arith.constant 0 : i32
    %c0_i32_0 = arith.constant 0 : i32
    %c0_i32_1 = arith.constant 0 : i32
    return %arg0, %c0_i32, %c0_i32_0 : i32, i32, i32
  }
  func.func @transform_6(%arg0: i32) -> (i32, i32, i32) {
    %c0_i32 = arith.constant 0 : i32
    %c0_i32_0 = arith.constant 0 : i32
    %c0_i32_1 = arith.constant 0 : i32
    return %arg0, %c0_i32, %c0_i32_0 : i32, i32, i32
  }
  func.func @transform_7(%arg0: i32) -> (i32, i32, i32) {
    %c0_i32 = arith.constant 0 : i32
    %c0_i32_0 = arith.constant 0 : i32
    %c0_i32_1 = arith.constant 0 : i32
    return %arg0, %c0_i32, %c0_i32_0 : i32, i32, i32
  }
  func.func @transform_8(%arg0: i32) -> (i32, i32, i32) {
    %c0_i32 = arith.constant 0 : i32
    %c0_i32_0 = arith.constant 0 : i32
    %c0_i32_1 = arith.constant 0 : i32
    return %arg0, %c0_i32, %c0_i32_0 : i32, i32, i32
  }
  func.func @transform_9(%arg0: i32) -> (i32, i32, i32) {
    %c0_i32 = arith.constant 0 : i32
    %c0_i32_0 = arith.constant 0 : i32
    %c0_i32_1 = arith.constant 0 : i32
    return %arg0, %c0_i32, %c0_i32_0 : i32, i32, i32
  }
  func.func @transform_10(%arg0: i32) -> (i32, i32, i32) {
    %c0_i32 = arith.constant 0 : i32
    %c0_i32_0 = arith.constant 0 : i32
    %c0_i32_1 = arith.constant 0 : i32
    return %arg0, %c0_i32, %c0_i32_0 : i32, i32, i32
  }
  func.func @transform_11(%arg0: i32) -> (i32, i32, i32) {
    %c0_i32 = arith.constant 0 : i32
    %c0_i32_0 = arith.constant 0 : i32
    %c0_i32_1 = arith.constant 0 : i32
    return %arg0, %c0_i32, %c0_i32_0 : i32, i32, i32
  }
  func.func @transform_12(%arg0: i32) -> (i32, i32, i32) {
    %c0_i32 = arith.constant 0 : i32
    %c0_i32_0 = arith.constant 0 : i32
    %c0_i32_1 = arith.constant 0 : i32
    return %arg0, %c0_i32, %c0_i32_0 : i32, i32, i32
  }
  func.func @transform_13(%arg0: i32) -> (i32, i32, i32) {
    %c0_i32 = arith.constant 0 : i32
    %c0_i32_0 = arith.constant 0 : i32
    %c0_i32_1 = arith.constant 0 : i32
    return %arg0, %c0_i32, %c0_i32_0 : i32, i32, i32
  }
  func.func @transform_14(%arg0: i32) -> (i32, i32, i32) {
    %c0_i32 = arith.constant 0 : i32
    %c0_i32_0 = arith.constant 0 : i32
    %c0_i32_1 = arith.constant 0 : i32
    return %arg0, %c0_i32, %c0_i32_0 : i32, i32, i32
  }
  func.func @transform_15(%arg0: i32) -> (i32, i32, i32) {
    %c0_i32 = arith.constant 0 : i32
    %c0_i32_0 = arith.constant 0 : i32
    %c0_i32_1 = arith.constant 0 : i32
    return %arg0, %c0_i32, %c0_i32_0 : i32, i32, i32
  }
  func.func @transform_16(%arg0: i32) -> (i32, i32, i32) {
    %c0_i32 = arith.constant 0 : i32
    %c0_i32_0 = arith.constant 0 : i32
    %c0_i32_1 = arith.constant 0 : i32
    return %arg0, %c0_i32, %c0_i32_0 : i32, i32, i32
  }
  func.func @transform_17(%arg0: i32) -> (i32, i32) {
    %c0_i32 = arith.constant 0 : i32
    %c0_i32_0 = arith.constant 0 : i32
    %c0_i32_1 = arith.constant 0 : i32
    return %c0_i32, %c0_i32_0 : i32, i32
  }
  func.func @transform_18(%arg0: i32) -> (i32, i32) {
    %c0_i32 = arith.constant 0 : i32
    %c0_i32_0 = arith.constant 0 : i32
    %c0_i32_1 = arith.constant 0 : i32
    return %c0_i32, %c0_i32_0 : i32, i32
  }
  func.func @transform_19(%arg0: i32) -> (i32, i32) {
    %c0_i32 = arith.constant 0 : i32
    %c0_i32_0 = arith.constant 0 : i32
    %c0_i32_1 = arith.constant 0 : i32
    return %c0_i32, %c0_i32_0 : i32, i32
  }
  func.func @transform_20(%arg0: i32) -> (i32, i32) {
    %c0_i32 = arith.constant 0 : i32
    %c0_i32_0 = arith.constant 0 : i32
    %c0_i32_1 = arith.constant 0 : i32
    return %c0_i32, %c0_i32_0 : i32, i32
  }
  func.func @transform_21(%arg0: i32) -> (i32, i32) {
    %c0_i32 = arith.constant 0 : i32
    %c0_i32_0 = arith.constant 0 : i32
    %c0_i32_1 = arith.constant 0 : i32
    return %c0_i32, %c0_i32_0 : i32, i32
  }
  func.func @transform_22(%arg0: i32) -> (i32, i32) {
    %c0_i32 = arith.constant 0 : i32
    %c0_i32_0 = arith.constant 0 : i32
    %c0_i32_1 = arith.constant 0 : i32
    return %c0_i32, %c0_i32_0 : i32, i32
  }
}

</mosaic_0001>

<llo_original>
// kernel: bert_with_extra_feature.1
$region0: #{bert_with_extra_feature.1}
  #allocation0 [shape = 'u32[]', space=smem, size = 0x4, offset = 0x4, fixed_abs, tag = 'smem constant byte address 0x4 - core index']
  #allocation1 [shape = 'u32[144,128]{1,0:T(1,128)}', space=vmem, size = 0x12000, scoped, tag = 'internal scratch']
  #allocation2 [shape = 'f32[16,32]{1,0:T(8,128)}', space=vmem, size = 0x2000, scoped, tag = 'scratch operand']
  %s0 = inlined_call_operand.vmem [shape: f32[16,32], index: 0, kind: input, shape index: {}]
  %s1 = inlined_call_operand.vmem [shape: f32[2,8], index: 1, kind: input, shape index: {}]
  %s2 = inlined_call_operand.vmem [shape: f32[2,1], index: 2, kind: input, shape index: {}]
  %s3 = inlined_call_operand.vmem [shape: f32[1,32], index: 3, kind: input, shape index: {}]
  %s4 = inlined_call_operand.vmem [shape: f32[1,32], index: 4, kind: input, shape index: {}]
  %s5 = inlined_call_operand.vmem [shape: bf16[2,32,96], index: 5, kind: input, shape index: {}]
  %s6 = inlined_call_operand.vmem [shape: f32[2,1,96], index: 6, kind: input, shape index: {}]
  %s7 = inlined_call_operand.vmem [shape: bf16[2,32,32], index: 7, kind: input, shape index: {}]
  %s8 = inlined_call_operand.vmem [shape: f32[2,1,32], index: 8, kind: input, shape index: {}]
  %s9 = inlined_call_operand.vmem [shape: f32[2,1,32], index: 9, kind: input, shape index: {}]
  %s10 = inlined_call_operand.vmem [shape: f32[2,1,32], index: 10, kind: input, shape index: {}]
  %s11 = inlined_call_operand.vmem [shape: bf16[2,32,64], index: 11, kind: input, shape index: {}]
  %s12 = inlined_call_operand.vmem [shape: f32[2,1,64], index: 12, kind: input, shape index: {}]
  %s13 = inlined_call_operand.vmem [shape: bf16[2,64,32], index: 13, kind: input, shape index: {}]
  %s14 = inlined_call_operand.vmem [shape: f32[2,1,32], index: 14, kind: input, shape index: {}]
  %s15 = inlined_call_operand.vmem [shape: f32[2,1,32], index: 15, kind: input, shape index: {}]
  %s16 = inlined_call_operand.vmem [shape: f32[2,1,32], index: 16, kind: input, shape index: {}]
  %s17 = inlined_call_operand.vmem [shape: bf16[32,32], index: 17, kind: input, shape index: {}]
  %s18 = inlined_call_operand.vmem [shape: f32[1,32], index: 18, kind: input, shape index: {}]
  %s19 = inlined_call_operand.vmem [shape: bf16[32,128], index: 19, kind: input, shape index: {}]
  %s20 = inlined_call_operand.vmem [shape: f32[1,128], index: 20, kind: input, shape index: {}]
  %s21 = inlined_call_operand.vmem [shape: f32[1,128], index: 21, kind: input, shape index: {}]
  %s22 = inlined_call_operand.hbm [shape: f32[2,128], index: 22, kind: output, shape index: {}]
  %s23 = sld [smem:[#allocation0]]
  $region129: #{bert_with_extra_feature.1} parent=0
    _
  %s25 = ssub.s32 1, %s23
  %s26 = scalar_select 0, %s25, %s23
  $region1: #{bert_with_extra_feature.1} parent=0
    #allocation3 [shape = 'u8[1024]{0}', space=vmem, size = 0x400, scoped, tag = 'output window, operand 0, single buffered']
    #allocation4 [shape = 's32[2]{0}', space=sflag, size = 0x8, scoped, tag = 'scoped memory for bert_with_extra_feature.1']
    %27 = vsyncpa [#allocation4], 0
    loop: start=0, step=1, limit=4
    $region2: #{bert_with_extra_feature.1} parent=1 // loop_pre_header
      _
    $region3: #{bert_with_extra_feature.1} parent=1 // loop_header
      %s29 = sphi 0, %s33
      %p30 = scmp.ge.s32.totalorder %s29, 4
      %s37 = sphi 0, %s37
      %s39 = sphi 0, %s37
      %s40 = sphi 0, %s39
      %s54 = sphi 0, %s40
      %s58 = sphi 0, %s58
      %s60 = sphi 0, %s58
      %s61 = sphi 0, %s60
      %s75 = sphi 0, %s61
      %s79 = sphi 0, %s79
      %s81 = sphi 0, %s79
      %s82 = sphi 0, %s81
      %s96 = sphi 0, %s82
      %s100 = sphi 0, %s100
      %s102 = sphi 0, %s100
      %s103 = sphi 0, %s102
      %s117 = sphi 0, %s103
      %s121 = sphi 0, %s121
      %s123 = sphi 0, %s121
      %s124 = sphi 0, %s123
      %s138 = sphi 0, %s124
      %s144 = sphi 0, %s146
      %s147 = sphi 0, %s144
      %s148 = sphi 0, %s147
      %s164 = sphi 0, %s148
      %s170 = sphi 0, %s172
      %s173 = sphi 0, %s170
      %s174 = sphi 0, %s173
      %s190 = sphi 0, %s174
      %s196 = sphi 0, %s198
      %s199 = sphi 0, %s196
      %s200 = sphi 0, %s199
      %s216 = sphi 0, %s200
      %s222 = sphi 0, %s224
      %s225 = sphi 0, %s222
      %s226 = sphi 0, %s225
      %s242 = sphi 0, %s226
      %s248 = sphi 0, %s250
      %s251 = sphi 0, %s248
      %s252 = sphi 0, %s251
      %s268 = sphi 0, %s252
      %s274 = sphi 0, %s276
      %s277 = sphi 0, %s274
      %s278 = sphi 0, %s277
      %s294 = sphi 0, %s278
      %s300 = sphi 0, %s302
      %s303 = sphi 0, %s300
      %s304 = sphi 0, %s303
      %s320 = sphi 0, %s304
      %s326 = sphi 0, %s328
      %s329 = sphi 0, %s326
      %s330 = sphi 0, %s329
      %s346 = sphi 0, %s330
      %s352 = sphi 0, %s354
      %s355 = sphi 0, %s352
      %s356 = sphi 0, %s355
      %s372 = sphi 0, %s356
      %s378 = sphi 0, %s380
      %s381 = sphi 0, %s378
      %s382 = sphi 0, %s381
      %s398 = sphi 0, %s382
      %s404 = sphi 0, %s406
      %s407 = sphi 0, %s404
      %s408 = sphi 0, %s407
      %s424 = sphi 0, %s408
      %s430 = sphi 0, %s432
      %s433 = sphi 0, %s430
      %s434 = sphi 0, %s433
      %s450 = sphi 0, %s434
      %s454 = sphi 0, %s454
      %s456 = sphi 0, %s454
      %s457 = sphi 0, %s456
      %s471 = sphi 0, %s457
      %s475 = sphi 0, %s475
      %s477 = sphi 0, %s475
      %s478 = sphi 0, %s477
      %s492 = sphi 0, %s478
      %s496 = sphi 0, %s496
      %s498 = sphi 0, %s496
      %s499 = sphi 0, %s498
      %s513 = sphi 0, %s499
      %s517 = sphi 0, %s517
      %s519 = sphi 0, %s517
      %s520 = sphi 0, %s519
      %s534 = sphi 0, %s520
      %s538 = sphi 0, %s538
      %s540 = sphi 0, %s538
      %s541 = sphi 0, %s540
      %s555 = sphi 0, %s541
      %s559 = sphi 0, %s559
      %s561 = sphi 0, %s559
      %s562 = sphi 0, %s561
      %s576 = sphi 0, %s562
    $region4: #{bert_with_extra_feature.1} parent=1 // loop_header_branch
      %32 = sbr.rel (%p30) target = $region8
    $region5: #{bert_with_extra_feature.1} parent=1 // loop_body
      %s34 = ssub.s32 %s29, 1
      %s35 = ssub.s32 %s29, 2
      %s36 = sadd.s32 %s29, 1
      %s38 = sadd.s32 %s37, 1
      %p41 = scmp.eq.s32.totalorder %s29, 1
      %p42 = scmp.ne.s32.totalorder %s37, %s39
      %p43 = scmp.eq.s32.totalorder %s29, 0
      %p44 = por %p42, %p43
      %p45 = scmp.ne.s32.totalorder %s37, %s39
      %p46 = scmp.eq.s32.totalorder %s34, 1
      %p47 = por %p45, %p46
      %p48 = scmp.ne.s32.totalorder %s39, %s40
      %p49 = scmp.eq.s32.totalorder %s34, 0
      %p50 = por %p48, %p49
      %p51 = scmp.ne.s32.totalorder %s39, %s40
      %p52 = scmp.eq.s32.totalorder %s35, 1
      %p53 = por %p51, %p52
      %p55 = scmp.ne.s32.totalorder %s40, %s54
      %p56 = scmp.eq.s32.totalorder %s35, 0
      %p57 = por %p55, %p56
      %s59 = sadd.s32 %s58, 1
      %p62 = scmp.eq.s32.totalorder %s29, 1
      %p63 = scmp.ne.s32.totalorder %s58, %s60
      %p64 = scmp.eq.s32.totalorder %s29, 0
      %p65 = por %p63, %p64
      %p66 = scmp.ne.s32.totalorder %s58, %s60
      %p67 = scmp.eq.s32.totalorder %s34, 1
      %p68 = por %p66, %p67
      %p69 = scmp.ne.s32.totalorder %s60, %s61
      %p70 = scmp.eq.s32.totalorder %s34, 0
      %p71 = por %p69, %p70
      %p72 = scmp.ne.s32.totalorder %s60, %s61
      %p73 = scmp.eq.s32.totalorder %s35, 1
      %p74 = por %p72, %p73
      %p76 = scmp.ne.s32.totalorder %s61, %s75
      %p77 = scmp.eq.s32.totalorder %s35, 0
      %p78 = por %p76, %p77
      %s80 = sadd.s32 %s79, 1
      %p83 = scmp.eq.s32.totalorder %s29, 1
      %p84 = scmp.ne.s32.totalorder %s79, %s81
      %p85 = scmp.eq.s32.totalorder %s29, 0
      %p86 = por %p84, %p85
      %p87 = scmp.ne.s32.totalorder %s79, %s81
      %p88 = scmp.eq.s32.totalorder %s34, 1
      %p89 = por %p87, %p88
      %p90 = scmp.ne.s32.totalorder %s81, %s82
      %p91 = scmp.eq.s32.totalorder %s34, 0
      %p92 = por %p90, %p91
      %p93 = scmp.ne.s32.totalorder %s81, %s82
      %p94 = scmp.eq.s32.totalorder %s35, 1
      %p95 = por %p93, %p94
      %p97 = scmp.ne.s32.totalorder %s82, %s96
      %p98 = scmp.eq.s32.totalorder %s35, 0
      %p99 = por %p97, %p98
      %s101 = sadd.s32 %s100, 1
      %p104 = scmp.eq.s32.totalorder %s29, 1
      %p105 = scmp.ne.s32.totalorder %s100, %s102
      %p106 = scmp.eq.s32.totalorder %s29, 0
      %p107 = por %p105, %p106
      %p108 = scmp.ne.s32.totalorder %s100, %s102
      %p109 = scmp.eq.s32.totalorder %s34, 1
      %p110 = por %p108, %p109
      %p111 = scmp.ne.s32.totalorder %s102, %s103
      %p112 = scmp.eq.s32.totalorder %s34, 0
      %p113 = por %p111, %p112
      %p114 = scmp.ne.s32.totalorder %s102, %s103
      %p115 = scmp.eq.s32.totalorder %s35, 1
      %p116 = por %p114, %p115
      %p118 = scmp.ne.s32.totalorder %s103, %s117
      %p119 = scmp.eq.s32.totalorder %s35, 0
      %p120 = por %p118, %p119
      %s122 = sadd.s32 %s121, 1
      %p125 = scmp.eq.s32.totalorder %s29, 1
      %p126 = scmp.ne.s32.totalorder %s121, %s123
      %p127 = scmp.eq.s32.totalorder %s29, 0
      %p128 = por %p126, %p127
      %p129 = scmp.ne.s32.totalorder %s121, %s123
      %p130 = scmp.eq.s32.totalorder %s34, 1
      %p131 = por %p129, %p130
      %p132 = scmp.ne.s32.totalorder %s123, %s124
      %p133 = scmp.eq.s32.totalorder %s34, 0
      %p134 = por %p132, %p133
      %p135 = scmp.ne.s32.totalorder %s123, %s124
      %p136 = scmp.eq.s32.totalorder %s35, 1
      %p137 = por %p135, %p136
      %p139 = scmp.ne.s32.totalorder %s124, %s138
      %p140 = scmp.eq.s32.totalorder %s35, 0
      %p141 = por %p139, %p140
      %s142 = ssub.s32 %s29, %s36
      %p143 = scmp.eq.s32.totalorder %s142, 0
      %s145 = sadd.s32 %s144, 1
      %s146 = scalar_select %p143, %s144, %s145
      %p149 = pneg %p143
      %p150 = scmp.eq.s32.totalorder %s29, 1
      %p151 = por %p149, %p150
      %p152 = scmp.ne.s32.totalorder %s144, %s147
      %p153 = scmp.eq.s32.totalorder %s29, 0
      %p154 = por %p152, %p153
      %p155 = scmp.ne.s32.totalorder %s144, %s147
      %p156 = scmp.eq.s32.totalorder %s34, 1
      %p157 = por %p155, %p156
      %p158 = scmp.ne.s32.totalorder %s147, %s148
      %p159 = scmp.eq.s32.totalorder %s34, 0
      %p160 = por %p158, %p159
      %p161 = scmp.ne.s32.totalorder %s147, %s148
      %p162 = scmp.eq.s32.totalorder %s35, 1
      %p163 = por %p161, %p162
      %p165 = scmp.ne.s32.totalorder %s148, %s164
      %p166 = scmp.eq.s32.totalorder %s35, 0
      %p167 = por %p165, %p166
      %s168 = ssub.s32 %s29, %s36
      %p169 = scmp.eq.s32.totalorder %s168, 0
      %s171 = sadd.s32 %s170, 1
      %s172 = scalar_select %p169, %s170, %s171
      %p175 = pneg %p169
      %p176 = scmp.eq.s32.totalorder %s29, 1
      %p177 = por %p175, %p176
      %p178 = scmp.ne.s32.totalorder %s170, %s173
      %p179 = scmp.eq.s32.totalorder %s29, 0
      %p180 = por %p178, %p179
      %p181 = scmp.ne.s32.totalorder %s170, %s173
      %p182 = scmp.eq.s32.totalorder %s34, 1
      %p183 = por %p181, %p182
      %p184 = scmp.ne.s32.totalorder %s173, %s174
      %p185 = scmp.eq.s32.totalorder %s34, 0
      %p186 = por %p184, %p185
      %p187 = scmp.ne.s32.totalorder %s173, %s174
      %p188 = scmp.eq.s32.totalorder %s35, 1
      %p189 = por %p187, %p188
      %p191 = scmp.ne.s32.totalorder %s174, %s190
      %p192 = scmp.eq.s32.totalorder %s35, 0
      %p193 = por %p191, %p192
      %s194 = ssub.s32 %s29, %s36
      %p195 = scmp.eq.s32.totalorder %s194, 0
      %s197 = sadd.s32 %s196, 1
      %s198 = scalar_select %p195, %s196, %s197
      %p201 = pneg %p195
      %p202 = scmp.eq.s32.totalorder %s29, 1
      %p203 = por %p201, %p202
      %p204 = scmp.ne.s32.totalorder %s196, %s199
      %p205 = scmp.eq.s32.totalorder %s29, 0
      %p206 = por %p204, %p205
      %p207 = scmp.ne.s32.totalorder %s196, %s199
      %p208 = scmp.eq.s32.totalorder %s34, 1
      %p209 = por %p207, %p208
      %p210 = scmp.ne.s32.totalorder %s199, %s200
      %p211 = scmp.eq.s32.totalorder %s34, 0
      %p212 = por %p210, %p211
      %p213 = scmp.ne.s32.totalorder %s199, %s200
      %p214 = scmp.eq.s32.totalorder %s35, 1
      %p215 = por %p213, %p214
      %p217 = scmp.ne.s32.totalorder %s200, %s216
      %p218 = scmp.eq.s32.totalorder %s35, 0
      %p219 = por %p217, %p218
      %s220 = ssub.s32 %s29, %s36
      %p221 = scmp.eq.s32.totalorder %s220, 0
      %s223 = sadd.s32 %s222, 1
      %s224 = scalar_select %p221, %s222, %s223
      %p227 = pneg %p221
      %p228 = scmp.eq.s32.totalorder %s29, 1
      %p229 = por %p227, %p228
      %p230 = scmp.ne.s32.totalorder %s222, %s225
      %p231 = scmp.eq.s32.totalorder %s29, 0
      %p232 = por %p230, %p231
      %p233 = scmp.ne.s32.totalorder %s222, %s225
      %p234 = scmp.eq.s32.totalorder %s34, 1
      %p235 = por %p233, %p234
      %p236 = scmp.ne.s32.totalorder %s225, %s226
      %p237 = scmp.eq.s32.totalorder %s34, 0
      %p238 = por %p236, %p237
      %p239 = scmp.ne.s32.totalorder %s225, %s226
      %p240 = scmp.eq.s32.totalorder %s35, 1
      %p241 = por %p239, %p240
      %p243 = scmp.ne.s32.totalorder %s226, %s242
      %p244 = scmp.eq.s32.totalorder %s35, 0
      %p245 = por %p243, %p244
      %s246 = ssub.s32 %s29, %s36
      %p247 = scmp.eq.s32.totalorder %s246, 0
      %s249 = sadd.s32 %s248, 1
      %s250 = scalar_select %p247, %s248, %s249
      %p253 = pneg %p247
      %p254 = scmp.eq.s32.totalorder %s29, 1
      %p255 = por %p253, %p254
      %p256 = scmp.ne.s32.totalorder %s248, %s251
      %p257 = scmp.eq.s32.totalorder %s29, 0
      %p258 = por %p256, %p257
      %p259 = scmp.ne.s32.totalorder %s248, %s251
      %p260 = scmp.eq.s32.totalorder %s34, 1
      %p261 = por %p259, %p260
      %p262 = scmp.ne.s32.totalorder %s251, %s252
      %p263 = scmp.eq.s32.totalorder %s34, 0
      %p264 = por %p262, %p263
      %p265 = scmp.ne.s32.totalorder %s251, %s252
      %p266 = scmp.eq.s32.totalorder %s35, 1
      %p267 = por %p265, %p266
      %p269 = scmp.ne.s32.totalorder %s252, %s268
      %p270 = scmp.eq.s32.totalorder %s35, 0
      %p271 = por %p269, %p270
      %s272 = ssub.s32 %s29, %s36
      %p273 = scmp.eq.s32.totalorder %s272, 0
      %s275 = sadd.s32 %s274, 1
      %s276 = scalar_select %p273, %s274, %s275
      %p279 = pneg %p273
      %p280 = scmp.eq.s32.totalorder %s29, 1
      %p281 = por %p279, %p280
      %p282 = scmp.ne.s32.totalorder %s274, %s277
      %p283 = scmp.eq.s32.totalorder %s29, 0
      %p284 = por %p282, %p283
      %p285 = scmp.ne.s32.totalorder %s274, %s277
      %p286 = scmp.eq.s32.totalorder %s34, 1
      %p287 = por %p285, %p286
      %p288 = scmp.ne.s32.totalorder %s277, %s278
      %p289 = scmp.eq.s32.totalorder %s34, 0
      %p290 = por %p288, %p289
      %p291 = scmp.ne.s32.totalorder %s277, %s278
      %p292 = scmp.eq.s32.totalorder %s35, 1
      %p293 = por %p291, %p292
      %p295 = scmp.ne.s32.totalorder %s278, %s294
      %p296 = scmp.eq.s32.totalorder %s35, 0
      %p297 = por %p295, %p296
      %s298 = ssub.s32 %s29, %s36
      %p299 = scmp.eq.s32.totalorder %s298, 0
      %s301 = sadd.s32 %s300, 1
      %s302 = scalar_select %p299, %s300, %s301
      %p305 = pneg %p299
      %p306 = scmp.eq.s32.totalorder %s29, 1
      %p307 = por %p305, %p306
      %p308 = scmp.ne.s32.totalorder %s300, %s303
      %p309 = scmp.eq.s32.totalorder %s29, 0
      %p310 = por %p308, %p309
      %p311 = scmp.ne.s32.totalorder %s300, %s303
      %p312 = scmp.eq.s32.totalorder %s34, 1
      %p313 = por %p311, %p312
      %p314 = scmp.ne.s32.totalorder %s303, %s304
      %p315 = scmp.eq.s32.totalorder %s34, 0
      %p316 = por %p314, %p315
      %p317 = scmp.ne.s32.totalorder %s303, %s304
      %p318 = scmp.eq.s32.totalorder %s35, 1
      %p319 = por %p317, %p318
      %p321 = scmp.ne.s32.totalorder %s304, %s320
      %p322 = scmp.eq.s32.totalorder %s35, 0
      %p323 = por %p321, %p322
      %s324 = ssub.s32 %s29, %s36
      %p325 = scmp.eq.s32.totalorder %s324, 0
      %s327 = sadd.s32 %s326, 1
      %s328 = scalar_select %p325, %s326, %s327
      %p331 = pneg %p325
      %p332 = scmp.eq.s32.totalorder %s29, 1
      %p333 = por %p331, %p332
      %p334 = scmp.ne.s32.totalorder %s326, %s329
      %p335 = scmp.eq.s32.totalorder %s29, 0
      %p336 = por %p334, %p335
      %p337 = scmp.ne.s32.totalorder %s326, %s329
      %p338 = scmp.eq.s32.totalorder %s34, 1
      %p339 = por %p337, %p338
      %p340 = scmp.ne.s32.totalorder %s329, %s330
      %p341 = scmp.eq.s32.totalorder %s34, 0
      %p342 = por %p340, %p341
      %p343 = scmp.ne.s32.totalorder %s329, %s330
      %p344 = scmp.eq.s32.totalorder %s35, 1
      %p345 = por %p343, %p344
      %p347 = scmp.ne.s32.totalorder %s330, %s346
      %p348 = scmp.eq.s32.totalorder %s35, 0
      %p349 = por %p347, %p348
      %s350 = ssub.s32 %s29, %s36
      %p351 = scmp.eq.s32.totalorder %s350, 0
      %s353 = sadd.s32 %s352, 1
      %s354 = scalar_select %p351, %s352, %s353
      %p357 = pneg %p351
      %p358 = scmp.eq.s32.totalorder %s29, 1
      %p359 = por %p357, %p358
      %p360 = scmp.ne.s32.totalorder %s352, %s355
      %p361 = scmp.eq.s32.totalorder %s29, 0
      %p362 = por %p360, %p361
      %p363 = scmp.ne.s32.totalorder %s352, %s355
      %p364 = scmp.eq.s32.totalorder %s34, 1
      %p365 = por %p363, %p364
      %p366 = scmp.ne.s32.totalorder %s355, %s356
      %p367 = scmp.eq.s32.totalorder %s34, 0
      %p368 = por %p366, %p367
      %p369 = scmp.ne.s32.totalorder %s355, %s356
      %p370 = scmp.eq.s32.totalorder %s35, 1
      %p371 = por %p369, %p370
      %p373 = scmp.ne.s32.totalorder %s356, %s372
      %p374 = scmp.eq.s32.totalorder %s35, 0
      %p375 = por %p373, %p374
      %s376 = ssub.s32 %s29, %s36
      %p377 = scmp.eq.s32.totalorder %s376, 0
      %s379 = sadd.s32 %s378, 1
      %s380 = scalar_select %p377, %s378, %s379
      %p383 = pneg %p377
      %p384 = scmp.eq.s32.totalorder %s29, 1
      %p385 = por %p383, %p384
      %p386 = scmp.ne.s32.totalorder %s378, %s381
      %p387 = scmp.eq.s32.totalorder %s29, 0
      %p388 = por %p386, %p387
      %p389 = scmp.ne.s32.totalorder %s378, %s381
      %p390 = scmp.eq.s32.totalorder %s34, 1
      %p391 = por %p389, %p390
      %p392 = scmp.ne.s32.totalorder %s381, %s382
      %p393 = scmp.eq.s32.totalorder %s34, 0
      %p394 = por %p392, %p393
      %p395 = scmp.ne.s32.totalorder %s381, %s382
      %p396 = scmp.eq.s32.totalorder %s35, 1
      %p397 = por %p395, %p396
      %p399 = scmp.ne.s32.totalorder %s382, %s398
      %p400 = scmp.eq.s32.totalorder %s35, 0
      %p401 = por %p399, %p400
      %s402 = ssub.s32 %s29, %s36
      %p403 = scmp.eq.s32.totalorder %s402, 0
      %s405 = sadd.s32 %s404, 1
      %s406 = scalar_select %p403, %s404, %s405
      %p409 = pneg %p403
      %p410 = scmp.eq.s32.totalorder %s29, 1
      %p411 = por %p409, %p410
      %p412 = scmp.ne.s32.totalorder %s404, %s407
      %p413 = scmp.eq.s32.totalorder %s29, 0
      %p414 = por %p412, %p413
      %p415 = scmp.ne.s32.totalorder %s404, %s407
      %p416 = scmp.eq.s32.totalorder %s34, 1
      %p417 = por %p415, %p416
      %p418 = scmp.ne.s32.totalorder %s407, %s408
      %p419 = scmp.eq.s32.totalorder %s34, 0
      %p420 = por %p418, %p419
      %p421 = scmp.ne.s32.totalorder %s407, %s408
      %p422 = scmp.eq.s32.totalorder %s35, 1
      %p423 = por %p421, %p422
      %p425 = scmp.ne.s32.totalorder %s408, %s424
      %p426 = scmp.eq.s32.totalorder %s35, 0
      %p427 = por %p425, %p426
      %s428 = ssub.s32 %s29, %s36
      %p429 = scmp.eq.s32.totalorder %s428, 0
      %s431 = sadd.s32 %s430, 1
      %s432 = scalar_select %p429, %s430, %s431
      %p435 = pneg %p429
      %p436 = scmp.eq.s32.totalorder %s29, 1
      %p437 = por %p435, %p436
      %p438 = scmp.ne.s32.totalorder %s430, %s433
      %p439 = scmp.eq.s32.totalorder %s29, 0
      %p440 = por %p438, %p439
      %p441 = scmp.ne.s32.totalorder %s430, %s433
      %p442 = scmp.eq.s32.totalorder %s34, 1
      %p443 = por %p441, %p442
      %p444 = scmp.ne.s32.totalorder %s433, %s434
      %p445 = scmp.eq.s32.totalorder %s34, 0
      %p446 = por %p444, %p445
      %p447 = scmp.ne.s32.totalorder %s433, %s434
      %p448 = scmp.eq.s32.totalorder %s35, 1
      %p449 = por %p447, %p448
      %p451 = scmp.ne.s32.totalorder %s434, %s450
      %p452 = scmp.eq.s32.totalorder %s35, 0
      %p453 = por %p451, %p452
      %s455 = sadd.s32 %s454, 1
      %p458 = scmp.eq.s32.totalorder %s29, 1
      %p459 = scmp.ne.s32.totalorder %s454, %s456
      %p460 = scmp.eq.s32.totalorder %s29, 0
      %p461 = por %p459, %p460
      %p462 = scmp.ne.s32.totalorder %s454, %s456
      %p463 = scmp.eq.s32.totalorder %s34, 1
      %p464 = por %p462, %p463
      %p465 = scmp.ne.s32.totalorder %s456, %s457
      %p466 = scmp.eq.s32.totalorder %s34, 0
      %p467 = por %p465, %p466
      %p468 = scmp.ne.s32.totalorder %s456, %s457
      %p469 = scmp.eq.s32.totalorder %s35, 1
      %p470 = por %p468, %p469
      %p472 = scmp.ne.s32.totalorder %s457, %s471
      %p473 = scmp.eq.s32.totalorder %s35, 0
      %p474 = por %p472, %p473
      %s476 = sadd.s32 %s475, 1
      %p479 = scmp.eq.s32.totalorder %s29, 1
      %p480 = scmp.ne.s32.totalorder %s475, %s477
      %p481 = scmp.eq.s32.totalorder %s29, 0
      %p482 = por %p480, %p481
      %p483 = scmp.ne.s32.totalorder %s475, %s477
      %p484 = scmp.eq.s32.totalorder %s34, 1
      %p485 = por %p483, %p484
      %p486 = scmp.ne.s32.totalorder %s477, %s478
      %p487 = scmp.eq.s32.totalorder %s34, 0
      %p488 = por %p486, %p487
      %p489 = scmp.ne.s32.totalorder %s477, %s478
      %p490 = scmp.eq.s32.totalorder %s35, 1
      %p491 = por %p489, %p490
      %p493 = scmp.ne.s32.totalorder %s478, %s492
      %p494 = scmp.eq.s32.totalorder %s35, 0
      %p495 = por %p493, %p494
      %s497 = sadd.s32 %s496, 1
      %p500 = scmp.eq.s32.totalorder %s29, 1
      %p501 = scmp.ne.s32.totalorder %s496, %s498
      %p502 = scmp.eq.s32.totalorder %s29, 0
      %p503 = por %p501, %p502
      %p504 = scmp.ne.s32.totalorder %s496, %s498
      %p505 = scmp.eq.s32.totalorder %s34, 1
      %p506 = por %p504, %p505
      %p507 = scmp.ne.s32.totalorder %s498, %s499
      %p508 = scmp.eq.s32.totalorder %s34, 0
      %p509 = por %p507, %p508
      %p510 = scmp.ne.s32.totalorder %s498, %s499
      %p511 = scmp.eq.s32.totalorder %s35, 1
      %p512 = por %p510, %p511
      %p514 = scmp.ne.s32.totalorder %s499, %s513
      %p515 = scmp.eq.s32.totalorder %s35, 0
      %p516 = por %p514, %p515
      %s518 = sadd.s32 %s517, 1
      %p521 = scmp.eq.s32.totalorder %s29, 1
      %p522 = scmp.ne.s32.totalorder %s517, %s519
      %p523 = scmp.eq.s32.totalorder %s29, 0
      %p524 = por %p522, %p523
      %p525 = scmp.ne.s32.totalorder %s517, %s519
      %p526 = scmp.eq.s32.totalorder %s34, 1
      %p527 = por %p525, %p526
      %p528 = scmp.ne.s32.totalorder %s519, %s520
      %p529 = scmp.eq.s32.totalorder %s34, 0
      %p530 = por %p528, %p529
      %p531 = scmp.ne.s32.totalorder %s519, %s520
      %p532 = scmp.eq.s32.totalorder %s35, 1
      %p533 = por %p531, %p532
      %p535 = scmp.ne.s32.totalorder %s520, %s534
      %p536 = scmp.eq.s32.totalorder %s35, 0
      %p537 = por %p535, %p536
      %s539 = sadd.s32 %s538, 1
      %p542 = scmp.eq.s32.totalorder %s29, 1
      %p543 = scmp.ne.s32.totalorder %s538, %s540
      %p544 = scmp.eq.s32.totalorder %s29, 0
      %p545 = por %p543, %p544
      %p546 = scmp.ne.s32.totalorder %s538, %s540
      %p547 = scmp.eq.s32.totalorder %s34, 1
      %p548 = por %p546, %p547
      %p549 = scmp.ne.s32.totalorder %s540, %s541
      %p550 = scmp.eq.s32.totalorder %s34, 0
      %p551 = por %p549, %p550
      %p552 = scmp.ne.s32.totalorder %s540, %s541
      %p553 = scmp.eq.s32.totalorder %s35, 1
      %p554 = por %p552, %p553
      %p556 = scmp.ne.s32.totalorder %s541, %s555
      %p557 = scmp.eq.s32.totalorder %s35, 0
      %p558 = por %p556, %p557
      %s560 = sadd.s32 %s559, 1
      %p563 = scmp.eq.s32.totalorder %s29, 1
      %p564 = scmp.ne.s32.totalorder %s559, %s561
      %p565 = scmp.eq.s32.totalorder %s29, 0
      %p566 = por %p564, %p565
      %p567 = scmp.ne.s32.totalorder %s559, %s561
      %p568 = scmp.eq.s32.totalorder %s34, 1
      %p569 = por %p567, %p568
      %p570 = scmp.ne.s32.totalorder %s561, %s562
      %p571 = scmp.eq.s32.totalorder %s34, 0
      %p572 = por %p570, %p571
      %p573 = scmp.ne.s32.totalorder %s561, %s562
      %p574 = scmp.eq.s32.totalorder %s35, 1
      %p575 = por %p573, %p574
      %p577 = scmp.ne.s32.totalorder %s562, %s576
      %p578 = scmp.eq.s32.totalorder %s35, 0
      %p579 = por %p577, %p578
      %p580 = scmp.le.s32.totalorder 1, %s29
      %p581 = scmp.lt.s32.totalorder %s29, 3
      %p582 = pnand %p580, %p581
      %p583 = pneg %p582
      // Predicated region
      $region9: #{bert_with_extra_feature.1} parent=5 // pred_check
        _
      $region10: #{bert_with_extra_feature.1} parent=5 // pred_check_branch
        %585 = sbr.rel (%p582) target = $region12
      $region11: #{bert_with_extra_feature.1} parent=5 // pred_region
        %s586 = ssub.s32 %s29, 1
        // Predicated region
        $region13: #{bert_with_extra_feature.1} parent=11 // pred_check
          %p587 = pneg %p50
        $region14: #{bert_with_extra_feature.1} parent=11 // pred_check_branch
          %589 = sbr.rel (%p587) target = $region16
        $region15: #{bert_with_extra_feature.1} parent=11 // pred_region
          _
        $region16: #{bert_with_extra_feature.1} parent=11 // pred_fallthru
          _
        // Predicated region
        $region17: #{bert_with_extra_feature.1} parent=11 // pred_check
          %p590 = pneg %p71
        $region18: #{bert_with_extra_feature.1} parent=11 // pred_check_branch
          %592 = sbr.rel (%p590) target = $region20
        $region19: #{bert_with_extra_feature.1} parent=11 // pred_region
          _
        $region20: #{bert_with_extra_feature.1} parent=11 // pred_fallthru
          _
        // Predicated region
        $region21: #{bert_with_extra_feature.1} parent=11 // pred_check
          %p593 = pneg %p92
        $region22: #{bert_with_extra_feature.1} parent=11 // pred_check_branch
          %595 = sbr.rel (%p593) target = $region24
        $region23: #{bert_with_extra_feature.1} parent=11 // pred_region
          _
        $region24: #{bert_with_extra_feature.1} parent=11 // pred_fallthru
          _
        // Predicated region
        $region25: #{bert_with_extra_feature.1} parent=11 // pred_check
          %p596 = pneg %p113
        $region26: #{bert_with_extra_feature.1} parent=11 // pred_check_branch
          %598 = sbr.rel (%p596) target = $region28
        $region27: #{bert_with_extra_feature.1} parent=11 // pred_region
          _
        $region28: #{bert_with_extra_feature.1} parent=11 // pred_fallthru
          _
        // Predicated region
        $region29: #{bert_with_extra_feature.1} parent=11 // pred_check
          %p599 = pneg %p134
        $region30: #{bert_with_extra_feature.1} parent=11 // pred_check_branch
          %601 = sbr.rel (%p599) target = $region32
        $region31: #{bert_with_extra_feature.1} parent=11 // pred_region
          _
        $region32: #{bert_with_extra_feature.1} parent=11 // pred_fallthru
          _
        // Predicated region
        $region33: #{bert_with_extra_feature.1} parent=11 // pred_check
          %p602 = pneg %p467
        $region34: #{bert_with_extra_feature.1} parent=11 // pred_check_branch
          %604 = sbr.rel (%p602) target = $region36
        $region35: #{bert_with_extra_feature.1} parent=11 // pred_region
          _
        $region36: #{bert_with_extra_feature.1} parent=11 // pred_fallthru
          _
        // Predicated region
        $region37: #{bert_with_extra_feature.1} parent=11 // pred_check
          %p605 = pneg %p488
        $region38: #{bert_with_extra_feature.1} parent=11 // pred_check_branch
          %607 = sbr.rel (%p605) target = $region40
        $region39: #{bert_with_extra_feature.1} parent=11 // pred_region
          _
        $region40: #{bert_with_extra_feature.1} parent=11 // pred_fallthru
          _
        // Predicated region
        $region41: #{bert_with_extra_feature.1} parent=11 // pred_check
          %p608 = pneg %p509
        $region42: #{bert_with_extra_feature.1} parent=11 // pred_check_branch
          %610 = sbr.rel (%p608) target = $region44
        $region43: #{bert_with_extra_feature.1} parent=11 // pred_region
          _
        $region44: #{bert_with_extra_feature.1} parent=11 // pred_fallthru
          _
        // Predicated region
        $region45: #{bert_with_extra_feature.1} parent=11 // pred_check
          %p611 = pneg %p530
        $region46: #{bert_with_extra_feature.1} parent=11 // pred_check_branch
          %613 = sbr.rel (%p611) target = $region48
        $region47: #{bert_with_extra_feature.1} parent=11 // pred_region
          _
        $region48: #{bert_with_extra_feature.1} parent=11 // pred_fallthru
          _
        // Predicated region
        $region49: #{bert_with_extra_feature.1} parent=11 // pred_check
          %p614 = pneg %p551
        $region50: #{bert_with_extra_feature.1} parent=11 // pred_check_branch
          %616 = sbr.rel (%p614) target = $region52
        $region51: #{bert_with_extra_feature.1} parent=11 // pred_region
          _
        $region52: #{bert_with_extra_feature.1} parent=11 // pred_fallthru
          _
      $region12: #{bert_with_extra_feature.1} parent=5 // pred_fallthru
        _
      %p617 = scmp.lt.s32.totalorder %s29, 2
      // Predicated region
      $region53: #{bert_with_extra_feature.1} parent=5 // pred_check
        %p618 = pneg %p617
      $region54: #{bert_with_extra_feature.1} parent=5 // pred_check_branch
        %620 = sbr.rel (%p618) target = $region56
      $region55: #{bert_with_extra_feature.1} parent=5 // pred_region
        // Predicated region
        $region57: #{bert_with_extra_feature.1} parent=55 // pred_check
          %p621 = pneg %p154
        $region58: #{bert_with_extra_feature.1} parent=55 // pred_check_branch
          %623 = sbr.rel (%p621) target = $region60
        $region59: #{bert_with_extra_feature.1} parent=55 // pred_region
          %p624 = scmp.lt.s32.totalorder %s29, 1
          %s625 = scalar_select %p624, %s29, 1
          %s626 = smul.addr %s625, 4
          %s627 = smul.addr %s626, 4
          %s628 = scalar_lea.vmem %s5, %s627
        $region60: #{bert_with_extra_feature.1} parent=55 // pred_fallthru
          _
        // Predicated region
        $region61: #{bert_with_extra_feature.1} parent=55 // pred_check
          %p629 = pneg %p180
        $region62: #{bert_with_extra_feature.1} parent=55 // pred_check_branch
          %631 = sbr.rel (%p629) target = $region64
        $region63: #{bert_with_extra_feature.1} parent=55 // pred_region
          %p632 = scmp.lt.s32.totalorder %s29, 1
          %s633 = scalar_select %p632, %s29, 1
          %s634 = scalar_lea.vmem %s6, %s633
        $region64: #{bert_with_extra_feature.1} parent=55 // pred_fallthru
          _
        // Predicated region
        $region65: #{bert_with_extra_feature.1} parent=55 // pred_check
          %p635 = pneg %p206
        $region66: #{bert_with_extra_feature.1} parent=55 // pred_check_branch
          %637 = sbr.rel (%p635) target = $region68
        $region67: #{bert_with_extra_feature.1} parent=55 // pred_region
          %p638 = scmp.lt.s32.totalorder %s29, 1
          %s639 = scalar_select %p638, %s29, 1
          %s640 = smul.addr %s639, 4
          %s641 = smul.addr %s640, 4
          %s642 = scalar_lea.vmem %s7, %s641
        $region68: #{bert_with_extra_feature.1} parent=55 // pred_fallthru
          _
        // Predicated region
        $region69: #{bert_with_extra_feature.1} parent=55 // pred_check
          %p643 = pneg %p232
        $region70: #{bert_with_extra_feature.1} parent=55 // pred_check_branch
          %645 = sbr.rel (%p643) target = $region72
        $region71: #{bert_with_extra_feature.1} parent=55 // pred_region
          %p646 = scmp.lt.s32.totalorder %s29, 1
          %s647 = scalar_select %p646, %s29, 1
          %s648 = scalar_lea.vmem %s8, %s647
        $region72: #{bert_with_extra_feature.1} parent=55 // pred_fallthru
          _
        // Predicated region
        $region73: #{bert_with_extra_feature.1} parent=55 // pred_check
          %p649 = pneg %p258
        $region74: #{bert_with_extra_feature.1} parent=55 // pred_check_branch
          %651 = sbr.rel (%p649) target = $region76
        $region75: #{bert_with_extra_feature.1} parent=55 // pred_region
          %p652 = scmp.lt.s32.totalorder %s29, 1
          %s653 = scalar_select %p652, %s29, 1
          %s654 = scalar_lea.vmem %s9, %s653
        $region76: #{bert_with_extra_feature.1} parent=55 // pred_fallthru
          _
        // Predicated region
        $region77: #{bert_with_extra_feature.1} parent=55 // pred_check
          %p655 = pneg %p284
        $region78: #{bert_with_extra_feature.1} parent=55 // pred_check_branch
          %657 = sbr.rel (%p655) target = $region80
        $region79: #{bert_with_extra_feature.1} parent=55 // pred_region
          %p658 = scmp.lt.s32.totalorder %s29, 1
          %s659 = scalar_select %p658, %s29, 1
          %s660 = scalar_lea.vmem %s10, %s659
        $region80: #{bert_with_extra_feature.1} parent=55 // pred_fallthru
          _
        // Predicated region
        $region81: #{bert_with_extra_feature.1} parent=55 // pred_check
          %p661 = pneg %p310
        $region82: #{bert_with_extra_feature.1} parent=55 // pred_check_branch
          %663 = sbr.rel (%p661) target = $region84
        $region83: #{bert_with_extra_feature.1} parent=55 // pred_region
          %p664 = scmp.lt.s32.totalorder %s29, 1
          %s665 = scalar_select %p664, %s29, 1
          %s666 = smul.addr %s665, 4
          %s667 = smul.addr %s666, 4
          %s668 = scalar_lea.vmem %s11, %s667
        $region84: #{bert_with_extra_feature.1} parent=55 // pred_fallthru
          _
        // Predicated region
        $region85: #{bert_with_extra_feature.1} parent=55 // pred_check
          %p669 = pneg %p336
        $region86: #{bert_with_extra_feature.1} parent=55 // pred_check_branch
          %671 = sbr.rel (%p669) target = $region88
        $region87: #{bert_with_extra_feature.1} parent=55 // pred_region
          %p672 = scmp.lt.s32.totalorder %s29, 1
          %s673 = scalar_select %p672, %s29, 1
          %s674 = scalar_lea.vmem %s12, %s673
        $region88: #{bert_with_extra_feature.1} parent=55 // pred_fallthru
          _
        // Predicated region
        $region89: #{bert_with_extra_feature.1} parent=55 // pred_check
          %p675 = pneg %p362
        $region90: #{bert_with_extra_feature.1} parent=55 // pred_check_branch
          %677 = sbr.rel (%p675) target = $region92
        $region91: #{bert_with_extra_feature.1} parent=55 // pred_region
          %p678 = scmp.lt.s32.totalorder %s29, 1
          %s679 = scalar_select %p678, %s29, 1
          %s680 = smul.addr %s679, 8
          %s681 = smul.addr %s680, 4
          %s682 = scalar_lea.vmem %s13, %s681
        $region92: #{bert_with_extra_feature.1} parent=55 // pred_fallthru
          _
        // Predicated region
        $region93: #{bert_with_extra_feature.1} parent=55 // pred_check
          %p683 = pneg %p388
        $region94: #{bert_with_extra_feature.1} parent=55 // pred_check_branch
          %685 = sbr.rel (%p683) target = $region96
        $region95: #{bert_with_extra_feature.1} parent=55 // pred_region
          %p686 = scmp.lt.s32.totalorder %s29, 1
          %s687 = scalar_select %p686, %s29, 1
          %s688 = scalar_lea.vmem %s14, %s687
        $region96: #{bert_with_extra_feature.1} parent=55 // pred_fallthru
          _
        // Predicated region
        $region97: #{bert_with_extra_feature.1} parent=55 // pred_check
          %p689 = pneg %p414
        $region98: #{bert_with_extra_feature.1} parent=55 // pred_check_branch
          %691 = sbr.rel (%p689) target = $region100
        $region99: #{bert_with_extra_feature.1} parent=55 // pred_region
          %p692 = scmp.lt.s32.totalorder %s29, 1
          %s693 = scalar_select %p692, %s29, 1
          %s694 = scalar_lea.vmem %s15, %s693
        $region100: #{bert_with_extra_feature.1} parent=55 // pred_fallthru
          _
        // Predicated region
        $region101: #{bert_with_extra_feature.1} parent=55 // pred_check
          %p695 = pneg %p440
        $region102: #{bert_with_extra_feature.1} parent=55 // pred_check_branch
          %697 = sbr.rel (%p695) target = $region104
        $region103: #{bert_with_extra_feature.1} parent=55 // pred_region
          %p698 = scmp.lt.s32.totalorder %s29, 1
          %s699 = scalar_select %p698, %s29, 1
          %s700 = scalar_lea.vmem %s16, %s699
        $region104: #{bert_with_extra_feature.1} parent=55 // pred_fallthru
          _
      $region56: #{bert_with_extra_feature.1} parent=5 // pred_fallthru
        _
      %p701 = scmp.le.s32.totalorder 1, %s29
      %p702 = scmp.lt.s32.totalorder %s29, 3
      %p703 = pnand %p701, %p702
      %p704 = pneg %p703
      // Predicated region
      $region105: #{bert_with_extra_feature.1} parent=5 // pred_check
        _
      $region106: #{bert_with_extra_feature.1} parent=5 // pred_check_branch
        %706 = sbr.rel (%p703) target = $region108
      $region107: #{bert_with_extra_feature.1} parent=5 // pred_region
        %s707 = ssub.s32 %s29, 1
        %p708 = pneg %p50
        %p709 = pneg %p47
        %p710 = pneg %p71
        %p711 = pneg %p68
        %p712 = pneg %p92
        %p713 = pneg %p89
        %p714 = pneg %p113
        %p715 = pneg %p110
        %p716 = pneg %p134
        %p717 = pneg %p131
        %p718 = scmp.lt.s32.totalorder %s34, 1
        %s719 = scalar_select %p718, %s34, 1
        %s720 = smul.addr %s719, 4
        %s721 = smul.addr %s720, 4
        %s722 = scalar_lea.vmem %s5, %s721
        %p723 = pneg %p160
        %p724 = pneg %p157
        %p725 = scmp.lt.s32.totalorder %s34, 1
        %s726 = scalar_select %p725, %s34, 1
        %s727 = scalar_lea.vmem %s6, %s726
        %p728 = pneg %p186
        %p729 = pneg %p183
        %p730 = scmp.lt.s32.totalorder %s34, 1
        %s731 = scalar_select %p730, %s34, 1
        %s732 = smul.addr %s731, 4
        %s733 = smul.addr %s732, 4
        %s734 = scalar_lea.vmem %s7, %s733
        %p735 = pneg %p212
        %p736 = pneg %p209
        %p737 = scmp.lt.s32.totalorder %s34, 1
        %s738 = scalar_select %p737, %s34, 1
        %s739 = scalar_lea.vmem %s8, %s738
        %p740 = pneg %p238
        %p741 = pneg %p235
        %p742 = scmp.lt.s32.totalorder %s34, 1
        %s743 = scalar_select %p742, %s34, 1
        %s744 = scalar_lea.vmem %s9, %s743
        %p745 = pneg %p264
        %p746 = pneg %p261
        %p747 = scmp.lt.s32.totalorder %s34, 1
        %s748 = scalar_select %p747, %s34, 1
        %s749 = scalar_lea.vmem %s10, %s748
        %p750 = pneg %p290
        %p751 = pneg %p287
        %p752 = scmp.lt.s32.totalorder %s34, 1
        %s753 = scalar_select %p752, %s34, 1
        %s754 = smul.addr %s753, 4
        %s755 = smul.addr %s754, 4
        %s756 = scalar_lea.vmem %s11, %s755
        %p757 = pneg %p316
        %p758 = pneg %p313
        %p759 = scmp.lt.s32.totalorder %s34, 1
        %s760 = scalar_select %p759, %s34, 1
        %s761 = scalar_lea.vmem %s12, %s760
        %p762 = pneg %p342
        %p763 = pneg %p339
        %p764 = scmp.lt.s32.totalorder %s34, 1
        %s765 = scalar_select %p764, %s34, 1
        %s766 = smul.addr %s765, 8
        %s767 = smul.addr %s766, 4
        %s768 = scalar_lea.vmem %s13, %s767
        %p769 = pneg %p368
        %p770 = pneg %p365
        %p771 = scmp.lt.s32.totalorder %s34, 1
        %s772 = scalar_select %p771, %s34, 1
        %s773 = scalar_lea.vmem %s14, %s772
        %p774 = pneg %p394
        %p775 = pneg %p391
        %p776 = scmp.lt.s32.totalorder %s34, 1
        %s777 = scalar_select %p776, %s34, 1
        %s778 = scalar_lea.vmem %s15, %s777
        %p779 = pneg %p420
        %p780 = pneg %p417
        %p781 = scmp.lt.s32.totalorder %s34, 1
        %s782 = scalar_select %p781, %s34, 1
        %s783 = scalar_lea.vmem %s16, %s782
        %p784 = pneg %p446
        %p785 = pneg %p443
        %p786 = pneg %p467
        %p787 = pneg %p464
        %p788 = pneg %p488
        %p789 = pneg %p485
        %p790 = pneg %p509
        %p791 = pneg %p506
        %p792 = pneg %p530
        %p793 = pneg %p527
        %p794 = pneg %p551
        %p795 = pneg %p548
        %p796 = pneg %p572
        %p797 = pneg %p569
        %p798 = scmp.lt.s32.totalorder %s34, 1
        %s799 = scalar_select %p798, %s34, 1
        %s800 = smul.addr %s799, 4
        %s801 = smul.addr %s800, 4
        %s802 = scalar_lea.vmem %s5, %s801
        %p803 = scmp.lt.s32.totalorder %s34, 1
        %s804 = scalar_select %p803, %s34, 1
        %s805 = scalar_lea.vmem %s6, %s804
        %p806 = scmp.lt.s32.totalorder %s34, 1
        %s807 = scalar_select %p806, %s34, 1
        %s808 = smul.addr %s807, 4
        %s809 = smul.addr %s808, 4
        %s810 = scalar_lea.vmem %s7, %s809
        %p811 = scmp.lt.s32.totalorder %s34, 1
        %s812 = scalar_select %p811, %s34, 1
        %s813 = scalar_lea.vmem %s8, %s812
        %p814 = scmp.lt.s32.totalorder %s34, 1
        %s815 = scalar_select %p814, %s34, 1
        %s816 = scalar_lea.vmem %s9, %s815
        %p817 = scmp.lt.s32.totalorder %s34, 1
        %s818 = scalar_select %p817, %s34, 1
        %s819 = scalar_lea.vmem %s10, %s818
        %p820 = scmp.lt.s32.totalorder %s34, 1
        %s821 = scalar_select %p820, %s34, 1
        %s822 = smul.addr %s821, 4
        %s823 = smul.addr %s822, 4
        %s824 = scalar_lea.vmem %s11, %s823
        %p825 = scmp.lt.s32.totalorder %s34, 1
        %s826 = scalar_select %p825, %s34, 1
        %s827 = scalar_lea.vmem %s12, %s826
        %p828 = scmp.lt.s32.totalorder %s34, 1
        %s829 = scalar_select %p828, %s34, 1
        %s830 = smul.addr %s829, 8
        %s831 = smul.addr %s830, 4
        %s832 = scalar_lea.vmem %s13, %s831
        %p833 = scmp.lt.s32.totalorder %s34, 1
        %s834 = scalar_select %p833, %s34, 1
        %s835 = scalar_lea.vmem %s14, %s834
        %p836 = scmp.lt.s32.totalorder %s34, 1
        %s837 = scalar_select %p836, %s34, 1
        %s838 = scalar_lea.vmem %s15, %s837
        %p839 = scmp.lt.s32.totalorder %s34, 1
        %s840 = scalar_select %p839, %s34, 1
        %s841 = scalar_lea.vmem %s16, %s840
        %p843 = scmp.eq.s32.totalorder %s34, 0
        // Predicated region
        $region109: #{bert_with_extra_feature.1} parent=107 // pred_check
          %p844 = pneg %p843
        $region110: #{bert_with_extra_feature.1} parent=107 // pred_check_branch
          %846 = sbr.rel (%p844) target = $region112
        $region111: #{bert_with_extra_feature.1} parent=107 // pred_region
          %v847 = vld [vmem:[%s0] sm:$0xff]
          %v848 = vld [vmem:[%s0 + $0x8] sm:$0xff]
          %v849 = vld [vmem:[%s3] sm:$0x1]
          %v850 = vld [vmem:[%s4] sm:$0x1]
          %vm851 = vcmask 261120
          %v852 = vsel %vm851, %v847, 0.0
          %853 = vadd.xlane.f32.xlu0 %v852
          %v854 = vpop.xlane.xlu0 %853
          %v855 = vsel %vm851, %v848, 0.0
          %856 = vadd.xlane.f32.xlu0 %v855
          %v857 = vpop.xlane.xlu0 %856
          %v858 = vrcp.pop 32.0
          %v859 = vmul.f32 %v854, %v858
          %v860 = vmul.f32 %v857, %v858
          %v861 = vsub.f32 %v847, %v859
          %v862 = vsub.f32 %v848, %v860
          %v863 = vmul.f32 %v861, %v861
          %v864 = vmul.f32 %v862, %v862
          %v865 = vsel %vm851, %v863, 0.0
          %866 = vadd.xlane.f32.xlu0 %v865
          %v867 = vpop.xlane.xlu0 %866
          %v868 = vsel %vm851, %v864, 0.0
          %869 = vadd.xlane.f32.xlu0 %v868
          %v870 = vpop.xlane.xlu0 %869
          %v871 = vmul.f32 %v867, %v858
          %v872 = vmul.f32 %v870, %v858
          %v873 = vadd.f32 %v871, 1e-12
          %v874 = vadd.f32 %v872, 1e-12
          %v875 = vrsqrt.pop %v873
          %v876 = vrsqrt.pop %v874
          %v877 = vmul.f32 %v861, %v875
          %v878 = vmul.f32 %v862, %v876
          %v880 = vlaneseq
          %v881 = vshrl.u32 %v880, 7
          %v882 = vsub.s32 0, %v881
          %v883 = vrot.slane %v849, %v882
          %v885 = vmul.f32 %v877, %v883
          %v886 = vmul.f32 %v878, %v883
          %v888 = vlaneseq
          %v889 = vshrl.u32 %v888, 7
          %v890 = vsub.s32 0, %v889
          %v891 = vrot.slane %v850, %v890
          %v893 = vadd.f32 %v885, %v891
          %v894 = vadd.f32 %v886, %v891
          %895 = vst.msk [vmem:[#allocation2] sm:$0xff] %vm851, %v893
          %896 = vst.msk [vmem:[#allocation2 + $0x8] sm:$0xff] %vm851, %v894
          %897 = vst [vmem:[#allocation3] sm:$0x3] 0.0
        $region112: #{bert_with_extra_feature.1} parent=107 // pred_fallthru
          _
        %v898 = vld [vmem:[#allocation2] sm:$0xff]
        %v899 = vld [vmem:[#allocation2 + $0x8] sm:$0xff]
        %v900 = vpack.c.bf16 %v899, %v898
        %v901 = vld [vmem:[%s802] sm:$0xf]
        %v902 = vld [vmem:[%s802 + $0x4] sm:$0xf]
        %v903 = vld [vmem:[%s802 + $0x8] sm:$0xf]
        %v904 = vld [vmem:[%s802 + $0xc] sm:$0xf]
        %v905 = vld [vmem:[%s805] sm:$0x1]
        %v907 = vlaneseq
        %v908 = vshrl.u32 %v907, 7
        %v909 = vsub.s32 0, %v908
        %v910 = vrot.slane %v905, %v909
        %v916 = vunpack.c.l.b16 %v901
        %v917 = vunpack.c.l.b16 %v902
        %v918 = vunpack.c.l.b16 %v903
        %v919 = vunpack.c.l.b16 %v904
        %v920 = vpack.c.b16 %v917, %v916
        %v921 = vpack.c.b16 %v919, %v918
        %vm924 = vcmask 261120
        %v926 = vsel %vm924, %v900, 0
        %928 = vmatprep.subr.bf16.mxu0 0
        %929 = vmatpush1.bf16.msra.mxu0 %v920
        %930 = vmatprep.subr.bf16.mxu0 0
        %931 = vmatpush1.bf16.msra.mxu0 %v921
        %932 = vmatprep.subr.bf16.mxu0 0
        %933 = vmatpush1.bf16.msra.mxu0 0
        %934 = vmatprep.subr.bf16.mxu0 0
        %935 = vmatpush1.bf16.msra.mxu0 0
        %936 = vmatprep.subr.bf16.mxu0 0
        %937 = vmatpush1.bf16.msra.mxu0 0
        %938 = vmatprep.subr.bf16.mxu0 0
        %939 = vmatpush1.bf16.msra.mxu0 0
        %940 = vmatprep.subr.bf16.mxu0 0
        %941 = vmatpush1.bf16.msra.mxu0 0
        %942 = vmatprep.subr.bf16.mxu0 0
        %943 = vmatpush1.bf16.msra.mxu0 0
        %944 = vmatprep.subr.bf16.mxu0 0
        %945 = vmatpush1.bf16.msra.mxu0 0
        %946 = vmatprep.subr.bf16.mxu0 0
        %947 = vmatpush1.bf16.msra.mxu0 0
        %948 = vmatprep.subr.bf16.mxu0 0
        %949 = vmatpush1.bf16.msra.mxu0 0
        %950 = vmatprep.subr.bf16.mxu0 0
        %951 = vmatpush1.bf16.msra.mxu0 0
        %952 = vmatprep.subr.bf16.mxu0 0
        %953 = vmatpush1.bf16.msra.mxu0 0
        %954 = vmatprep.subr.bf16.mxu0 0
        %955 = vmatpush1.bf16.msra.mxu0 0
        %956 = vmatprep.subr.bf16.mxu0 0
        %957 = vmatpush1.bf16.msra.mxu0 0
        %958 = vmatprep.subr.bf16.mxu0 0
        %959 = vmatpush1.bf16.msra.mxu0 0
        %960 = vmatprep.mubr.bf16.mxu0 0
        %961 = vmatmul.mubr.bf16.gmra.mrb[0].mxu0 %v926
        %v962 = vpop.f32.mrb[0].mxu0
        %v963 = vadd.f32 %v910, %v962
        %v964 = vpop.f32.mrb[0].mxu0
        %v965 = vpop.f32.mrb[0].mxu0
        %v966 = vadd.f32 %v910, %v965
        %v967 = vpop.f32.mrb[0].mxu0
        %968 = vdwg.mxu0
        %v969 = vld [vmem:[%s810] sm:$0xf]
        %v970 = vld [vmem:[%s810 + $0x4] sm:$0xf]
        %v971 = vld [vmem:[%s810 + $0x8] sm:$0xf]
        %v972 = vld [vmem:[%s810 + $0xc] sm:$0xf]
        %v973 = vld [vmem:[%s1] sm:$0x3]
        %v974 = vpack.c.bf16 %v963, %v963
        %v975 = vlaneseq
        %v976 = vshrl.u32 %v975, 7
        %v977 = vsub.s32 0, %v976
        %v978 = vrot.slane %v973, %v977
        %980 = vrot.lane.b32.xlu0 %v974, 112
        %v981 = vpop.permute.xlu0 %980
        %vm982 = vcmask 130048
        %v984 = vsel %vm982, %v974, 0
        %v987 = vsel %vm982, %v981, 0
        %989 = vmatprep.subr.bf16.mxu0 0
        %990 = vmatpush1.bf16.xpose.msra.mxu0 %v987
        %991 = vmatprep.subr.bf16.mxu0 0
        %992 = vmatpush1.bf16.xpose.msra.mxu0 0
        %993 = vmatprep.subr.bf16.mxu0 0
        %994 = vmatpush1.bf16.xpose.msra.mxu0 0
        %995 = vmatprep.subr.bf16.mxu0 0
        %996 = vmatpush1.bf16.xpose.msra.mxu0 0
        %997 = vmatprep.subr.bf16.mxu0 0
        %998 = vmatpush1.bf16.xpose.msra.mxu0 0
        %999 = vmatprep.subr.bf16.mxu0 0
        %1000 = vmatpush1.bf16.xpose.msra.mxu0 0
        %1001 = vmatprep.subr.bf16.mxu0 0
        %1002 = vmatpush1.bf16.xpose.msra.mxu0 0
        %1003 = vmatprep.subr.bf16.mxu0 0
        %1004 = vmatpush1.bf16.xpose.msra.mxu0 0
        %1005 = vmatprep.subr.bf16.mxu0 0
        %1006 = vmatpush1.bf16.xpose.msra.mxu0 0
        %1007 = vmatprep.subr.bf16.mxu0 0
        %1008 = vmatpush1.bf16.xpose.msra.mxu0 0
        %1009 = vmatprep.subr.bf16.mxu0 0
        %1010 = vmatpush1.bf16.xpose.msra.mxu0 0
        %1011 = vmatprep.subr.bf16.mxu0 0
        %1012 = vmatpush1.bf16.xpose.msra.mxu0 0
        %1013 = vmatprep.subr.bf16.mxu0 0
        %1014 = vmatpush1.bf16.xpose.msra.mxu0 0
        %1015 = vmatprep.subr.bf16.mxu0 0
        %1016 = vmatpush1.bf16.xpose.msra.mxu0 0
        %1017 = vmatprep.subr.bf16.mxu0 0
        %1018 = vmatpush1.bf16.xpose.msra.mxu0 0
        %1019 = vmatprep.subr.bf16.mxu0 0
        %1020 = vmatpush1.bf16.xpose.msra.mxu0 0
        %1021 = vmatprep.mubr.bf16.mxu0 0
        %1022 = vmatmul.mubr.bf16.gmra.mrb[0].mxu0 %v984
        %v1023 = vpop.f32.mrb[0].mxu0
        %v1024 = vadd.f32 %v978, %v1023
        %v1025 = vpop.f32.mrb[0].mxu0
        %v1026 = vpop.f32.mrb[0].mxu0
        %v1027 = vpop.f32.mrb[0].mxu0
        %1028 = vdwg.mxu0
        %vm1029 = vcmask 64512
        %v1030 = vsel %vm1029, %v1024, -inf
        %1031 = vmax.xlane.f32.xlu0 %v1030
        %v1032 = vpop.xlane.xlu0 %1031
        %v1033 = vsub.f32 %v1024, %v1032
        %v1034 = vmul.f32 %v1033, 1.442695
        %v1035 = vpow.pop %v1034
        %v1036 = vsel %vm1029, %v1035, 0.0
        %1037 = vadd.xlane.f32.xlu0 %v1036
        %v1038 = vpop.xlane.xlu0 %1037
        %v1039 = vrcp.pop %v1038
        %v1040 = vmul.f32 %v1035, %v1039
        %v1041 = vpack.c.bf16 %v1040, %v1040
        %1042 = vrot.lane.b32.xlu0 %v974, 96
        %v1043 = vpop.permute.xlu0 %1042
        %v1045 = vsel %vm1029, %v1041, 0
        %vm1047 = vcmask 1043456
        %v1049 = vsel %vm1047, %v1043, 0
        %1051 = vmatprep.subr.bf16.mxu0 0
        %1052 = vmatpush1.bf16.msra.mxu0 %v1049
        %1053 = vmatprep.subr.bf16.mxu0 0
        %1054 = vmatpush1.bf16.msra.mxu0 0
        %1055 = vmatprep.subr.bf16.mxu0 0
        %1056 = vmatpush1.bf16.msra.mxu0 0
        %1057 = vmatprep.subr.bf16.mxu0 0
        %1058 = vmatpush1.bf16.msra.mxu0 0
        %1059 = vmatprep.subr.bf16.mxu0 0
        %1060 = vmatpush1.bf16.msra.mxu0 0
        %1061 = vmatprep.subr.bf16.mxu0 0
        %1062 = vmatpush1.bf16.msra.mxu0 0
        %1063 = vmatprep.subr.bf16.mxu0 0
        %1064 = vmatpush1.bf16.msra.mxu0 0
        %1065 = vmatprep.subr.bf16.mxu0 0
        %1066 = vmatpush1.bf16.msra.mxu0 0
        %1067 = vmatprep.subr.bf16.mxu0 0
        %1068 = vmatpush1.bf16.msra.mxu0 0
        %1069 = vmatprep.subr.bf16.mxu0 0
        %1070 = vmatpush1.bf16.msra.mxu0 0
        %1071 = vmatprep.subr.bf16.mxu0 0
        %1072 = vmatpush1.bf16.msra.mxu0 0
        %1073 = vmatprep.subr.bf16.mxu0 0
        %1074 = vmatpush1.bf16.msra.mxu0 0
        %1075 = vmatprep.subr.bf16.mxu0 0
        %1076 = vmatpush1.bf16.msra.mxu0 0
        %1077 = vmatprep.subr.bf16.mxu0 0
        %1078 = vmatpush1.bf16.msra.mxu0 0
        %1079 = vmatprep.subr.bf16.mxu0 0
        %1080 = vmatpush1.bf16.msra.mxu0 0
        %1081 = vmatprep.subr.bf16.mxu0 0
        %1082 = vmatpush1.bf16.msra.mxu0 0
        %1083 = vmatprep.mubr.bf16.mxu0 0
        %1084 = vmatmul.mubr.bf16.gmra.mrb[0].mxu0 %v1045
        %v1085 = vpop.f32.mrb[0].mxu0
        %v1086 = vadd.f32 0.0, %v1085
        %v1087 = vpop.f32.mrb[0].mxu0
        %v1088 = vpop.f32.mrb[0].mxu0
        %v1089 = vpop.f32.mrb[0].mxu0
        %1090 = vdwg.mxu0
        %v1091 = vpack.c.bf16 %v1086, %v1086
        %1092 = vrot.lane.b32.xlu0 %v974, 80
        %v1093 = vpop.permute.xlu0 %1092
        %1094 = vrot.lane.b32.xlu0 %v974, 64
        %v1095 = vpop.permute.xlu0 %1094
        %v1097 = vsel %vm982, %v1093, 0
        %v1100 = vsel %vm982, %v1095, 0
        %1102 = vmatprep.subr.bf16.mxu0 0
        %1103 = vmatpush1.bf16.xpose.msra.mxu0 %v1100
        %1104 = vmatprep.subr.bf16.mxu0 0
        %1105 = vmatpush1.bf16.xpose.msra.mxu0 0
        %1106 = vmatprep.subr.bf16.mxu0 0
        %1107 = vmatpush1.bf16.xpose.msra.mxu0 0
        %1108 = vmatprep.subr.bf16.mxu0 0
        %1109 = vmatpush1.bf16.xpose.msra.mxu0 0
        %1110 = vmatprep.subr.bf16.mxu0 0
        %1111 = vmatpush1.bf16.xpose.msra.mxu0 0
        %1112 = vmatprep.subr.bf16.mxu0 0
        %1113 = vmatpush1.bf16.xpose.msra.mxu0 0
        %1114 = vmatprep.subr.bf16.mxu0 0
        %1115 = vmatpush1.bf16.xpose.msra.mxu0 0
        %1116 = vmatprep.subr.bf16.mxu0 0
        %1117 = vmatpush1.bf16.xpose.msra.mxu0 0
        %1118 = vmatprep.subr.bf16.mxu0 0
        %1119 = vmatpush1.bf16.xpose.msra.mxu0 0
        %1120 = vmatprep.subr.bf16.mxu0 0
        %1121 = vmatpush1.bf16.xpose.msra.mxu0 0
        %1122 = vmatprep.subr.bf16.mxu0 0
        %1123 = vmatpush1.bf16.xpose.msra.mxu0 0
        %1124 = vmatprep.subr.bf16.mxu0 0
        %1125 = vmatpush1.bf16.xpose.msra.mxu0 0
        %1126 = vmatprep.subr.bf16.mxu0 0
        %1127 = vmatpush1.bf16.xpose.msra.mxu0 0
        %1128 = vmatprep.subr.bf16.mxu0 0
        %1129 = vmatpush1.bf16.xpose.msra.mxu0 0
        %1130 = vmatprep.subr.bf16.mxu0 0
        %1131 = vmatpush1.bf16.xpose.msra.mxu0 0
        %1132 = vmatprep.subr.bf16.mxu0 0
        %1133 = vmatpush1.bf16.xpose.msra.mxu0 0
        %1134 = vmatprep.mubr.bf16.mxu0 0
        %1135 = vmatmul.mubr.bf16.gmra.mrb[0].mxu0 %v1097
        %v1136 = vpop.f32.mrb[0].mxu0
        %v1137 = vadd.f32 %v978, %v1136
        %v1138 = vpop.f32.mrb[0].mxu0
        %v1139 = vpop.f32.mrb[0].mxu0
        %v1140 = vpop.f32.mrb[0].mxu0
        %1141 = vdwg.mxu0
        %v1142 = vsel %vm1029, %v1137, -inf
        %1143 = vmax.xlane.f32.xlu0 %v1142
        %v1144 = vpop.xlane.xlu0 %1143
        %v1145 = vsub.f32 %v1137, %v1144
        %v1146 = vmul.f32 %v1145, 1.442695
        %v1147 = vpow.pop %v1146
        %v1148 = vsel %vm1029, %v1147, 0.0
        %1149 = vadd.xlane.f32.xlu0 %v1148
        %v1150 = vpop.xlane.xlu0 %1149
        %v1151 = vrcp.pop %v1150
        %v1152 = vmul.f32 %v1147, %v1151
        %v1153 = vpack.c.bf16 %v1152, %v1152
        %1154 = vrot.lane.b32.xlu0 %v974, 48
        %v1155 = vpop.permute.xlu0 %1154
        %v1157 = vsel %vm1029, %v1153, 0
        %v1160 = vsel %vm1047, %v1155, 0
        %1162 = vmatprep.subr.bf16.mxu0 0
        %1163 = vmatpush1.bf16.msra.mxu0 %v1160
        %1164 = vmatprep.subr.bf16.mxu0 0
        %1165 = vmatpush1.bf16.msra.mxu0 0
        %1166 = vmatprep.subr.bf16.mxu0 0
        %1167 = vmatpush1.bf16.msra.mxu0 0
        %1168 = vmatprep.subr.bf16.mxu0 0
        %1169 = vmatpush1.bf16.msra.mxu0 0
        %1170 = vmatprep.subr.bf16.mxu0 0
        %1171 = vmatpush1.bf16.msra.mxu0 0
        %1172 = vmatprep.subr.bf16.mxu0 0
        %1173 = vmatpush1.bf16.msra.mxu0 0
        %1174 = vmatprep.subr.bf16.mxu0 0
        %1175 = vmatpush1.bf16.msra.mxu0 0
        %1176 = vmatprep.subr.bf16.mxu0 0
        %1177 = vmatpush1.bf16.msra.mxu0 0
        %1178 = vmatprep.subr.bf16.mxu0 0
        %1179 = vmatpush1.bf16.msra.mxu0 0
        %1180 = vmatprep.subr.bf16.mxu0 0
        %1181 = vmatpush1.bf16.msra.mxu0 0
        %1182 = vmatprep.subr.bf16.mxu0 0
        %1183 = vmatpush1.bf16.msra.mxu0 0
        %1184 = vmatprep.subr.bf16.mxu0 0
        %1185 = vmatpush1.bf16.msra.mxu0 0
        %1186 = vmatprep.subr.bf16.mxu0 0
        %1187 = vmatpush1.bf16.msra.mxu0 0
        %1188 = vmatprep.subr.bf16.mxu0 0
        %1189 = vmatpush1.bf16.msra.mxu0 0
        %1190 = vmatprep.subr.bf16.mxu0 0
        %1191 = vmatpush1.bf16.msra.mxu0 0
        %1192 = vmatprep.subr.bf16.mxu0 0
        %1193 = vmatpush1.bf16.msra.mxu0 0
        %1194 = vmatprep.mubr.bf16.mxu0 0
        %1195 = vmatmul.mubr.bf16.gmra.mrb[0].mxu0 %v1157
        %v1196 = vpop.f32.mrb[0].mxu0
        %v1197 = vadd.f32 0.0, %v1196
        %v1198 = vpop.f32.mrb[0].mxu0
        %v1199 = vpop.f32.mrb[0].mxu0
        %v1200 = vpop.f32.mrb[0].mxu0
        %1201 = vdwg.mxu0
        %v1202 = vpack.c.bf16 %v1197, %v1197
        %v1205 = vunpack.c.l.b16 %v971
        %v1206 = vunpack.c.l.b16 %v972
        %v1207 = vpack.c.b16 %v1206, %v1205
        %v1210 = vsel %vm982, %v1202, 0
        %1212 = vmatprep.subr.bf16.mxu0 0
        %1213 = vmatpush1.bf16.msra.mxu0 %v1207
        %1214 = vmatprep.subr.bf16.mxu0 0
        %1215 = vmatpush1.bf16.msra.mxu0 0
        %1216 = vmatprep.subr.bf16.mxu0 0
        %1217 = vmatpush1.bf16.msra.mxu0 0
        %1218 = vmatprep.subr.bf16.mxu0 0
        %1219 = vmatpush1.bf16.msra.mxu0 0
        %1220 = vmatprep.subr.bf16.mxu0 0
        %1221 = vmatpush1.bf16.msra.mxu0 0
        %1222 = vmatprep.subr.bf16.mxu0 0
        %1223 = vmatpush1.bf16.msra.mxu0 0
        %1224 = vmatprep.subr.bf16.mxu0 0
        %1225 = vmatpush1.bf16.msra.mxu0 0
        %1226 = vmatprep.subr.bf16.mxu0 0
        %1227 = vmatpush1.bf16.msra.mxu0 0
        %1228 = vmatprep.subr.bf16.mxu0 0
        %1229 = vmatpush1.bf16.msra.mxu0 0
        %1230 = vmatprep.subr.bf16.mxu0 0
        %1231 = vmatpush1.bf16.msra.mxu0 0
        %1232 = vmatprep.subr.bf16.mxu0 0
        %1233 = vmatpush1.bf16.msra.mxu0 0
        %1234 = vmatprep.subr.bf16.mxu0 0
        %1235 = vmatpush1.bf16.msra.mxu0 0
        %1236 = vmatprep.subr.bf16.mxu0 0
        %1237 = vmatpush1.bf16.msra.mxu0 0
        %1238 = vmatprep.subr.bf16.mxu0 0
        %1239 = vmatpush1.bf16.msra.mxu0 0
        %1240 = vmatprep.subr.bf16.mxu0 0
        %1241 = vmatpush1.bf16.msra.mxu0 0
        %1242 = vmatprep.subr.bf16.mxu0 0
        %1243 = vmatpush1.bf16.msra.mxu0 0
        %1244 = vmatprep.mubr.bf16.mxu0 0
        %1245 = vmatmul.mubr.bf16.gmra.mrb[0].mxu0 %v1210
        %v1246 = vpop.f32.mrb[0].mxu0
        %v1247 = vadd.f32 0.0, %v1246
        %v1248 = vpop.f32.mrb[0].mxu0
        %v1249 = vpop.f32.mrb[0].mxu0
        %v1250 = vpop.f32.mrb[0].mxu0
        %1251 = vdwg.mxu0
        %v1254 = vunpack.c.l.b16 %v969
        %v1255 = vunpack.c.l.b16 %v970
        %v1256 = vpack.c.b16 %v1255, %v1254
        %v1259 = vsel %vm982, %v1091, 0
        %1261 = vmatprep.subr.bf16.mxu0 0
        %1262 = vmatpush1.bf16.msra.mxu0 %v1256
        %1263 = vmatprep.subr.bf16.mxu0 0
        %1264 = vmatpush1.bf16.msra.mxu0 0
        %1265 = vmatprep.subr.bf16.mxu0 0
        %1266 = vmatpush1.bf16.msra.mxu0 0
        %1267 = vmatprep.subr.bf16.mxu0 0
        %1268 = vmatpush1.bf16.msra.mxu0 0
        %1269 = vmatprep.subr.bf16.mxu0 0
        %1270 = vmatpush1.bf16.msra.mxu0 0
        %1271 = vmatprep.subr.bf16.mxu0 0
        %1272 = vmatpush1.bf16.msra.mxu0 0
        %1273 = vmatprep.subr.bf16.mxu0 0
        %1274 = vmatpush1.bf16.msra.mxu0 0
        %1275 = vmatprep.subr.bf16.mxu0 0
        %1276 = vmatpush1.bf16.msra.mxu0 0
        %1277 = vmatprep.subr.bf16.mxu0 0
        %1278 = vmatpush1.bf16.msra.mxu0 0
        %1279 = vmatprep.subr.bf16.mxu0 0
        %1280 = vmatpush1.bf16.msra.mxu0 0
        %1281 = vmatprep.subr.bf16.mxu0 0
        %1282 = vmatpush1.bf16.msra.mxu0 0
        %1283 = vmatprep.subr.bf16.mxu0 0
        %1284 = vmatpush1.bf16.msra.mxu0 0
        %1285 = vmatprep.subr.bf16.mxu0 0
        %1286 = vmatpush1.bf16.msra.mxu0 0
        %1287 = vmatprep.subr.bf16.mxu0 0
        %1288 = vmatpush1.bf16.msra.mxu0 0
        %1289 = vmatprep.subr.bf16.mxu0 0
        %1290 = vmatpush1.bf16.msra.mxu0 0
        %1291 = vmatprep.subr.bf16.mxu0 0
        %1292 = vmatpush1.bf16.msra.mxu0 0
        %1293 = vmatprep.mubr.bf16.mxu0 0
        %1294 = vmatmul.mubr.bf16.gmra.mrb[0].mxu0 %v1259
        %v1295 = vpop.f32.mrb[0].mxu0
        %v1296 = vadd.f32 %v1247, %v1295
        %v1297 = vpop.f32.mrb[0].mxu0
        %v1298 = vpop.f32.mrb[0].mxu0
        %v1299 = vpop.f32.mrb[0].mxu0
        %1300 = vdwg.mxu0
        %v1301 = vpack.c.bf16 %v966, %v966
        %v1302 = vlaneseq
        %v1303 = vshrl.u32 %v1302, 7
        %v1304 = vsub.s32 1, %v1303
        %v1305 = vrot.slane %v973, %v1304
        %1307 = vrot.lane.b32.xlu0 %v1301, 112
        %v1308 = vpop.permute.xlu0 %1307
        %v1310 = vsel %vm982, %v1301, 0
        %v1313 = vsel %vm982, %v1308, 0
        %1315 = vmatprep.subr.bf16.mxu0 0
        %1316 = vmatpush1.bf16.xpose.msra.mxu0 %v1313
        %1317 = vmatprep.subr.bf16.mxu0 0
        %1318 = vmatpush1.bf16.xpose.msra.mxu0 0
        %1319 = vmatprep.subr.bf16.mxu0 0
        %1320 = vmatpush1.bf16.xpose.msra.mxu0 0
        %1321 = vmatprep.subr.bf16.mxu0 0
        %1322 = vmatpush1.bf16.xpose.msra.mxu0 0
        %1323 = vmatprep.subr.bf16.mxu0 0
        %1324 = vmatpush1.bf16.xpose.msra.mxu0 0
        %1325 = vmatprep.subr.bf16.mxu0 0
        %1326 = vmatpush1.bf16.xpose.msra.mxu0 0
        %1327 = vmatprep.subr.bf16.mxu0 0
        %1328 = vmatpush1.bf16.xpose.msra.mxu0 0
        %1329 = vmatprep.subr.bf16.mxu0 0
        %1330 = vmatpush1.bf16.xpose.msra.mxu0 0
        %1331 = vmatprep.subr.bf16.mxu0 0
        %1332 = vmatpush1.bf16.xpose.msra.mxu0 0
        %1333 = vmatprep.subr.bf16.mxu0 0
        %1334 = vmatpush1.bf16.xpose.msra.mxu0 0
        %1335 = vmatprep.subr.bf16.mxu0 0
        %1336 = vmatpush1.bf16.xpose.msra.mxu0 0
        %1337 = vmatprep.subr.bf16.mxu0 0
        %1338 = vmatpush1.bf16.xpose.msra.mxu0 0
        %1339 = vmatprep.subr.bf16.mxu0 0
        %1340 = vmatpush1.bf16.xpose.msra.mxu0 0
        %1341 = vmatprep.subr.bf16.mxu0 0
        %1342 = vmatpush1.bf16.xpose.msra.mxu0 0
        %1343 = vmatprep.subr.bf16.mxu0 0
        %1344 = vmatpush1.bf16.xpose.msra.mxu0 0
        %1345 = vmatprep.subr.bf16.mxu0 0
        %1346 = vmatpush1.bf16.xpose.msra.mxu0 0
        %1347 = vmatprep.mubr.bf16.mxu0 0
        %1348 = vmatmul.mubr.bf16.gmra.mrb[0].mxu0 %v1310
        %v1349 = vpop.f32.mrb[0].mxu0
        %v1350 = vadd.f32 %v1305, %v1349
        %v1351 = vpop.f32.mrb[0].mxu0
        %v1352 = vpop.f32.mrb[0].mxu0
        %v1353 = vpop.f32.mrb[0].mxu0
        %1354 = vdwg.mxu0
        %v1355 = vsel %vm1029, %v1350, -inf
        %1356 = vmax.xlane.f32.xlu0 %v1355
        %v1357 = vpop.xlane.xlu0 %1356
        %v1358 = vsub.f32 %v1350, %v1357
        %v1359 = vmul.f32 %v1358, 1.442695
        %v1360 = vpow.pop %v1359
        %v1361 = vsel %vm1029, %v1360, 0.0
        %1362 = vadd.xlane.f32.xlu0 %v1361
        %v1363 = vpop.xlane.xlu0 %1362
        %v1364 = vrcp.pop %v1363
        %v1365 = vmul.f32 %v1360, %v1364
        %v1366 = vpack.c.bf16 %v1365, %v1365
        %1367 = vrot.lane.b32.xlu0 %v1301, 96
        %v1368 = vpop.permute.xlu0 %1367
        %v1370 = vsel %vm1029, %v1366, 0
        %v1373 = vsel %vm1047, %v1368, 0
        %1375 = vmatprep.subr.bf16.mxu0 0
        %1376 = vmatpush1.bf16.msra.mxu0 %v1373
        %1377 = vmatprep.subr.bf16.mxu0 0
        %1378 = vmatpush1.bf16.msra.mxu0 0
        %1379 = vmatprep.subr.bf16.mxu0 0
        %1380 = vmatpush1.bf16.msra.mxu0 0
        %1381 = vmatprep.subr.bf16.mxu0 0
        %1382 = vmatpush1.bf16.msra.mxu0 0
        %1383 = vmatprep.subr.bf16.mxu0 0
        %1384 = vmatpush1.bf16.msra.mxu0 0
        %1385 = vmatprep.subr.bf16.mxu0 0
        %1386 = vmatpush1.bf16.msra.mxu0 0
        %1387 = vmatprep.subr.bf16.mxu0 0
        %1388 = vmatpush1.bf16.msra.mxu0 0
        %1389 = vmatprep.subr.bf16.mxu0 0
        %1390 = vmatpush1.bf16.msra.mxu0 0
        %1391 = vmatprep.subr.bf16.mxu0 0
        %1392 = vmatpush1.bf16.msra.mxu0 0
        %1393 = vmatprep.subr.bf16.mxu0 0
        %1394 = vmatpush1.bf16.msra.mxu0 0
        %1395 = vmatprep.subr.bf16.mxu0 0
        %1396 = vmatpush1.bf16.msra.mxu0 0
        %1397 = vmatprep.subr.bf16.mxu0 0
        %1398 = vmatpush1.bf16.msra.mxu0 0
        %1399 = vmatprep.subr.bf16.mxu0 0
        %1400 = vmatpush1.bf16.msra.mxu0 0
        %1401 = vmatprep.subr.bf16.mxu0 0
        %1402 = vmatpush1.bf16.msra.mxu0 0
        %1403 = vmatprep.subr.bf16.mxu0 0
        %1404 = vmatpush1.bf16.msra.mxu0 0
        %1405 = vmatprep.subr.bf16.mxu0 0
        %1406 = vmatpush1.bf16.msra.mxu0 0
        %1407 = vmatprep.mubr.bf16.mxu0 0
        %1408 = vmatmul.mubr.bf16.gmra.mrb[0].mxu0 %v1370
        %v1409 = vpop.f32.mrb[0].mxu0
        %v1410 = vadd.f32 0.0, %v1409
        %v1411 = vpop.f32.mrb[0].mxu0
        %v1412 = vpop.f32.mrb[0].mxu0
        %v1413 = vpop.f32.mrb[0].mxu0
        %1414 = vdwg.mxu0
        %v1415 = vpack.c.bf16 %v1410, %v1410
        %1416 = vrot.lane.b32.xlu0 %v1301, 80
        %v1417 = vpop.permute.xlu0 %1416
        %1418 = vrot.lane.b32.xlu0 %v1301, 64
        %v1419 = vpop.permute.xlu0 %1418
        %v1421 = vsel %vm982, %v1417, 0
        %v1424 = vsel %vm982, %v1419, 0
        %1426 = vmatprep.subr.bf16.mxu0 0
        %1427 = vmatpush1.bf16.xpose.msra.mxu0 %v1424
        %1428 = vmatprep.subr.bf16.mxu0 0
        %1429 = vmatpush1.bf16.xpose.msra.mxu0 0
        %1430 = vmatprep.subr.bf16.mxu0 0
        %1431 = vmatpush1.bf16.xpose.msra.mxu0 0
        %1432 = vmatprep.subr.bf16.mxu0 0
        %1433 = vmatpush1.bf16.xpose.msra.mxu0 0
        %1434 = vmatprep.subr.bf16.mxu0 0
        %1435 = vmatpush1.bf16.xpose.msra.mxu0 0
        %1436 = vmatprep.subr.bf16.mxu0 0
        %1437 = vmatpush1.bf16.xpose.msra.mxu0 0
        %1438 = vmatprep.subr.bf16.mxu0 0
        %1439 = vmatpush1.bf16.xpose.msra.mxu0 0
        %1440 = vmatprep.subr.bf16.mxu0 0
        %1441 = vmatpush1.bf16.xpose.msra.mxu0 0
        %1442 = vmatprep.subr.bf16.mxu0 0
        %1443 = vmatpush1.bf16.xpose.msra.mxu0 0
        %1444 = vmatprep.subr.bf16.mxu0 0
        %1445 = vmatpush1.bf16.xpose.msra.mxu0 0
        %1446 = vmatprep.subr.bf16.mxu0 0
        %1447 = vmatpush1.bf16.xpose.msra.mxu0 0
        %1448 = vmatprep.subr.bf16.mxu0 0
        %1449 = vmatpush1.bf16.xpose.msra.mxu0 0
        %1450 = vmatprep.subr.bf16.mxu0 0
        %1451 = vmatpush1.bf16.xpose.msra.mxu0 0
        %1452 = vmatprep.subr.bf16.mxu0 0
        %1453 = vmatpush1.bf16.xpose.msra.mxu0 0
        %1454 = vmatprep.subr.bf16.mxu0 0
        %1455 = vmatpush1.bf16.xpose.msra.mxu0 0
        %1456 = vmatprep.subr.bf16.mxu0 0
        %1457 = vmatpush1.bf16.xpose.msra.mxu0 0
        %1458 = vmatprep.mubr.bf16.mxu0 0
        %1459 = vmatmul.mubr.bf16.gmra.mrb[0].mxu0 %v1421
        %v1460 = vpop.f32.mrb[0].mxu0
        %v1461 = vadd.f32 %v1305, %v1460
        %v1462 = vpop.f32.mrb[0].mxu0
        %v1463 = vpop.f32.mrb[0].mxu0
        %v1464 = vpop.f32.mrb[0].mxu0
        %1465 = vdwg.mxu0
        %v1466 = vsel %vm1029, %v1461, -inf
        %1467 = vmax.xlane.f32.xlu0 %v1466
        %v1468 = vpop.xlane.xlu0 %1467
        %v1469 = vsub.f32 %v1461, %v1468
        %v1470 = vmul.f32 %v1469, 1.442695
        %v1471 = vpow.pop %v1470
        %v1472 = vsel %vm1029, %v1471, 0.0
        %1473 = vadd.xlane.f32.xlu0 %v1472
        %v1474 = vpop.xlane.xlu0 %1473
        %v1475 = vrcp.pop %v1474
        %v1476 = vmul.f32 %v1471, %v1475
        %v1477 = vpack.c.bf16 %v1476, %v1476
        %1478 = vrot.lane.b32.xlu0 %v1301, 48
        %v1479 = vpop.permute.xlu0 %1478
        %v1481 = vsel %vm1029, %v1477, 0
        %v1484 = vsel %vm1047, %v1479, 0
        %1486 = vmatprep.subr.bf16.mxu0 0
        %1487 = vmatpush1.bf16.msra.mxu0 %v1484
        %1488 = vmatprep.subr.bf16.mxu0 0
        %1489 = vmatpush1.bf16.msra.mxu0 0
        %1490 = vmatprep.subr.bf16.mxu0 0
        %1491 = vmatpush1.bf16.msra.mxu0 0
        %1492 = vmatprep.subr.bf16.mxu0 0
        %1493 = vmatpush1.bf16.msra.mxu0 0
        %1494 = vmatprep.subr.bf16.mxu0 0
        %1495 = vmatpush1.bf16.msra.mxu0 0
        %1496 = vmatprep.subr.bf16.mxu0 0
        %1497 = vmatpush1.bf16.msra.mxu0 0
        %1498 = vmatprep.subr.bf16.mxu0 0
        %1499 = vmatpush1.bf16.msra.mxu0 0
        %1500 = vmatprep.subr.bf16.mxu0 0
        %1501 = vmatpush1.bf16.msra.mxu0 0
        %1502 = vmatprep.subr.bf16.mxu0 0
        %1503 = vmatpush1.bf16.msra.mxu0 0
        %1504 = vmatprep.subr.bf16.mxu0 0
        %1505 = vmatpush1.bf16.msra.mxu0 0
        %1506 = vmatprep.subr.bf16.mxu0 0
        %1507 = vmatpush1.bf16.msra.mxu0 0
        %1508 = vmatprep.subr.bf16.mxu0 0
        %1509 = vmatpush1.bf16.msra.mxu0 0
        %1510 = vmatprep.subr.bf16.mxu0 0
        %1511 = vmatpush1.bf16.msra.mxu0 0
        %1512 = vmatprep.subr.bf16.mxu0 0
        %1513 = vmatpush1.bf16.msra.mxu0 0
        %1514 = vmatprep.subr.bf16.mxu0 0
        %1515 = vmatpush1.bf16.msra.mxu0 0
        %1516 = vmatprep.subr.bf16.mxu0 0
        %1517 = vmatpush1.bf16.msra.mxu0 0
        %1518 = vmatprep.mubr.bf16.mxu0 0
        %1519 = vmatmul.mubr.bf16.gmra.mrb[0].mxu0 %v1481
        %v1520 = vpop.f32.mrb[0].mxu0
        %v1521 = vadd.f32 0.0, %v1520
        %v1522 = vpop.f32.mrb[0].mxu0
        %v1523 = vpop.f32.mrb[0].mxu0
        %v1524 = vpop.f32.mrb[0].mxu0
        %1525 = vdwg.mxu0
        %v1526 = vpack.c.bf16 %v1521, %v1521
        %v1528 = vsel %vm982, %v1526, 0
        %1530 = vmatprep.subr.bf16.mxu0 0
        %1531 = vmatpush1.bf16.msra.mxu0 %v1207
        %1532 = vmatprep.subr.bf16.mxu0 0
        %1533 = vmatpush1.bf16.msra.mxu0 0
        %1534 = vmatprep.subr.bf16.mxu0 0
        %1535 = vmatpush1.bf16.msra.mxu0 0
        %1536 = vmatprep.subr.bf16.mxu0 0
        %1537 = vmatpush1.bf16.msra.mxu0 0
        %1538 = vmatprep.subr.bf16.mxu0 0
        %1539 = vmatpush1.bf16.msra.mxu0 0
        %1540 = vmatprep.subr.bf16.mxu0 0
        %1541 = vmatpush1.bf16.msra.mxu0 0
        %1542 = vmatprep.subr.bf16.mxu0 0
        %1543 = vmatpush1.bf16.msra.mxu0 0
        %1544 = vmatprep.subr.bf16.mxu0 0
        %1545 = vmatpush1.bf16.msra.mxu0 0
        %1546 = vmatprep.subr.bf16.mxu0 0
        %1547 = vmatpush1.bf16.msra.mxu0 0
        %1548 = vmatprep.subr.bf16.mxu0 0
        %1549 = vmatpush1.bf16.msra.mxu0 0
        %1550 = vmatprep.subr.bf16.mxu0 0
        %1551 = vmatpush1.bf16.msra.mxu0 0
        %1552 = vmatprep.subr.bf16.mxu0 0
        %1553 = vmatpush1.bf16.msra.mxu0 0
        %1554 = vmatprep.subr.bf16.mxu0 0
        %1555 = vmatpush1.bf16.msra.mxu0 0
        %1556 = vmatprep.subr.bf16.mxu0 0
        %1557 = vmatpush1.bf16.msra.mxu0 0
        %1558 = vmatprep.subr.bf16.mxu0 0
        %1559 = vmatpush1.bf16.msra.mxu0 0
        %1560 = vmatprep.subr.bf16.mxu0 0
        %1561 = vmatpush1.bf16.msra.mxu0 0
        %1562 = vmatprep.mubr.bf16.mxu0 0
        %1563 = vmatmul.mubr.bf16.gmra.mrb[0].mxu0 %v1528
        %v1564 = vpop.f32.mrb[0].mxu0
        %v1565 = vadd.f32 0.0, %v1564
        %v1566 = vpop.f32.mrb[0].mxu0
        %v1567 = vpop.f32.mrb[0].mxu0
        %v1568 = vpop.f32.mrb[0].mxu0
        %1569 = vdwg.mxu0
        %v1571 = vsel %vm982, %v1415, 0
        %1573 = vmatprep.subr.bf16.mxu0 0
        %1574 = vmatpush1.bf16.msra.mxu0 %v1256
        %1575 = vmatprep.subr.bf16.mxu0 0
        %1576 = vmatpush1.bf16.msra.mxu0 0
        %1577 = vmatprep.subr.bf16.mxu0 0
        %1578 = vmatpush1.bf16.msra.mxu0 0
        %1579 = vmatprep.subr.bf16.mxu0 0
        %1580 = vmatpush1.bf16.msra.mxu0 0
        %1581 = vmatprep.subr.bf16.mxu0 0
        %1582 = vmatpush1.bf16.msra.mxu0 0
        %1583 = vmatprep.subr.bf16.mxu0 0
        %1584 = vmatpush1.bf16.msra.mxu0 0
        %1585 = vmatprep.subr.bf16.mxu0 0
        %1586 = vmatpush1.bf16.msra.mxu0 0
        %1587 = vmatprep.subr.bf16.mxu0 0
        %1588 = vmatpush1.bf16.msra.mxu0 0
        %1589 = vmatprep.subr.bf16.mxu0 0
        %1590 = vmatpush1.bf16.msra.mxu0 0
        %1591 = vmatprep.subr.bf16.mxu0 0
        %1592 = vmatpush1.bf16.msra.mxu0 0
        %1593 = vmatprep.subr.bf16.mxu0 0
        %1594 = vmatpush1.bf16.msra.mxu0 0
        %1595 = vmatprep.subr.bf16.mxu0 0
        %1596 = vmatpush1.bf16.msra.mxu0 0
        %1597 = vmatprep.subr.bf16.mxu0 0
        %1598 = vmatpush1.bf16.msra.mxu0 0
        %1599 = vmatprep.subr.bf16.mxu0 0
        %1600 = vmatpush1.bf16.msra.mxu0 0
        %1601 = vmatprep.subr.bf16.mxu0 0
        %1602 = vmatpush1.bf16.msra.mxu0 0
        %1603 = vmatprep.subr.bf16.mxu0 0
        %1604 = vmatpush1.bf16.msra.mxu0 0
        %1605 = vmatprep.mubr.bf16.mxu0 0
        %1606 = vmatmul.mubr.bf16.gmra.mrb[0].mxu0 %v1571
        %v1607 = vpop.f32.mrb[0].mxu0
        %v1608 = vadd.f32 %v1565, %v1607
        %v1609 = vpop.f32.mrb[0].mxu0
        %v1610 = vpop.f32.mrb[0].mxu0
        %v1611 = vpop.f32.mrb[0].mxu0
        %1612 = vdwg.mxu0
        %v1613 = vld [vmem:[%s813] sm:$0x1]
        %v1615 = vlaneseq
        %v1616 = vshrl.u32 %v1615, 7
        %v1617 = vsub.s32 0, %v1616
        %v1618 = vrot.slane %v1613, %v1617
        %v1620 = vadd.f32 %v1296, %v1618
        %v1621 = vadd.f32 %v1608, %v1618
        %v1622 = vadd.f32 %v898, %v1620
        %v1623 = vadd.f32 %v899, %v1621
        %v1624 = vld [vmem:[%s816] sm:$0x1]
        %v1625 = vld [vmem:[%s819] sm:$0x1]
        %v1626 = vsel %vm924, %v1622, 0.0
        %1627 = vadd.xlane.f32.xlu0 %v1626
        %v1628 = vpop.xlane.xlu0 %1627
        %v1629 = vsel %vm924, %v1623, 0.0
        %1630 = vadd.xlane.f32.xlu0 %v1629
        %v1631 = vpop.xlane.xlu0 %1630
        %v1632 = vrcp.pop 32.0
        %v1633 = vmul.f32 %v1628, %v1632
        %v1634 = vmul.f32 %v1631, %v1632
        %v1635 = vsub.f32 %v1622, %v1633
        %v1636 = vsub.f32 %v1623, %v1634
        %v1637 = vmul.f32 %v1635, %v1635
        %v1638 = vmul.f32 %v1636, %v1636
        %v1639 = vsel %vm924, %v1637, 0.0
        %1640 = vadd.xlane.f32.xlu0 %v1639
        %v1641 = vpop.xlane.xlu0 %1640
        %v1642 = vsel %vm924, %v1638, 0.0
        %1643 = vadd.xlane.f32.xlu0 %v1642
        %v1644 = vpop.xlane.xlu0 %1643
        %v1645 = vmul.f32 %v1641, %v1632
        %v1646 = vmul.f32 %v1644, %v1632
        %v1647 = vadd.f32 %v1645, 1e-12
        %v1648 = vadd.f32 %v1646, 1e-12
        %v1649 = vrsqrt.pop %v1647
        %v1650 = vrsqrt.pop %v1648
        %v1651 = vmul.f32 %v1635, %v1649
        %v1652 = vmul.f32 %v1636, %v1650
        %v1654 = vlaneseq
        %v1655 = vshrl.u32 %v1654, 7
        %v1656 = vsub.s32 0, %v1655
        %v1657 = vrot.slane %v1624, %v1656
        %v1659 = vmul.f32 %v1651, %v1657
        %v1660 = vmul.f32 %v1652, %v1657
        %v1662 = vlaneseq
        %v1663 = vshrl.u32 %v1662, 7
        %v1664 = vsub.s32 0, %v1663
        %v1665 = vrot.slane %v1625, %v1664
        %v1667 = vadd.f32 %v1659, %v1665
        %v1668 = vadd.f32 %v1660, %v1665
        %v1669 = vpack.c.bf16 %v1668, %v1667
        %v1670 = vld [vmem:[%s824] sm:$0xf]
        %v1671 = vld [vmem:[%s824 + $0x4] sm:$0xf]
        %v1672 = vld [vmem:[%s824 + $0x8] sm:$0xf]
        %v1673 = vld [vmem:[%s824 + $0xc] sm:$0xf]
        %v1674 = vld [vmem:[%s827] sm:$0x1]
        %v1676 = vlaneseq
        %v1677 = vshrl.u32 %v1676, 7
        %v1678 = vsub.s32 0, %v1677
        %v1679 = vrot.slane %v1674, %v1678
        %v1685 = vunpack.c.l.b16 %v1670
        %v1686 = vunpack.c.l.b16 %v1671
        %v1687 = vunpack.c.l.b16 %v1672
        %v1688 = vunpack.c.l.b16 %v1673
        %v1689 = vpack.c.b16 %v1686, %v1685
        %v1690 = vpack.c.b16 %v1688, %v1687
        %v1694 = vsel %vm924, %v1669, 0
        %1696 = vmatprep.subr.bf16.mxu0 0
        %1697 = vmatpush1.bf16.msra.mxu0 %v1689
        %1698 = vmatprep.subr.bf16.mxu0 0
        %1699 = vmatpush1.bf16.msra.mxu0 %v1690
        %1700 = vmatprep.subr.bf16.mxu0 0
        %1701 = vmatpush1.bf16.msra.mxu0 0
        %1702 = vmatprep.subr.bf16.mxu0 0
        %1703 = vmatpush1.bf16.msra.mxu0 0
        %1704 = vmatprep.subr.bf16.mxu0 0
        %1705 = vmatpush1.bf16.msra.mxu0 0
        %1706 = vmatprep.subr.bf16.mxu0 0
        %1707 = vmatpush1.bf16.msra.mxu0 0
        %1708 = vmatprep.subr.bf16.mxu0 0
        %1709 = vmatpush1.bf16.msra.mxu0 0
        %1710 = vmatprep.subr.bf16.mxu0 0
        %1711 = vmatpush1.bf16.msra.mxu0 0
        %1712 = vmatprep.subr.bf16.mxu0 0
        %1713 = vmatpush1.bf16.msra.mxu0 0
        %1714 = vmatprep.subr.bf16.mxu0 0
        %1715 = vmatpush1.bf16.msra.mxu0 0
        %1716 = vmatprep.subr.bf16.mxu0 0
        %1717 = vmatpush1.bf16.msra.mxu0 0
        %1718 = vmatprep.subr.bf16.mxu0 0
        %1719 = vmatpush1.bf16.msra.mxu0 0
        %1720 = vmatprep.subr.bf16.mxu0 0
        %1721 = vmatpush1.bf16.msra.mxu0 0
        %1722 = vmatprep.subr.bf16.mxu0 0
        %1723 = vmatpush1.bf16.msra.mxu0 0
        %1724 = vmatprep.subr.bf16.mxu0 0
        %1725 = vmatpush1.bf16.msra.mxu0 0
        %1726 = vmatprep.subr.bf16.mxu0 0
        %1727 = vmatpush1.bf16.msra.mxu0 0
        %1728 = vmatprep.mubr.bf16.mxu0 0
        %1729 = vmatmul.mubr.bf16.gmra.mrb[0].mxu0 %v1694
        %v1730 = vpop.f32.mrb[0].mxu0
        %v1731 = vadd.f32 %v1679, %v1730
        %v1732 = vpop.f32.mrb[0].mxu0
        %v1733 = vpop.f32.mrb[0].mxu0
        %v1734 = vadd.f32 %v1679, %v1733
        %v1735 = vpop.f32.mrb[0].mxu0
        %1736 = vdwg.mxu0
        %v1737 = vmul.f32 %v1731, 0.5
        %v1738 = vmul.f32 %v1734, 0.5
        %v1739 = vmul.f32 %v1731, 0.044715
        %v1740 = vmul.f32 %v1734, 0.044715
        %v1741 = vmul.f32 %v1739, %v1731
        %v1742 = vmul.f32 %v1740, %v1734
        %v1743 = vmul.f32 %v1741, %v1731
        %v1744 = vmul.f32 %v1742, %v1734
        %v1745 = vadd.f32 %v1731, %v1743
        %v1746 = vadd.f32 %v1734, %v1744
        %v1747 = vmul.f32 %v1745, 0.7978846
        %v1748 = vmul.f32 %v1746, 0.7978846
        %v1749 = vtanh.pop %v1747
        %v1750 = vtanh.pop %v1748
        %v1751 = vadd.f32 %v1749, 1.0
        %v1752 = vadd.f32 %v1750, 1.0
        %v1753 = vmul.f32 %v1737, %v1751
        %v1754 = vmul.f32 %v1738, %v1752
        %v1755 = vpack.c.bf16 %v1754, %v1753
        %v1756 = vld [vmem:[%s832] sm:$0xf]
        %v1757 = vld [vmem:[%s832 + $0x4] sm:$0xf]
        %v1758 = vld [vmem:[%s832 + $0x8] sm:$0xf]
        %v1759 = vld [vmem:[%s832 + $0xc] sm:$0xf]
        %v1760 = vld [vmem:[%s832 + $0x10] sm:$0xf]
        %v1761 = vld [vmem:[%s832 + $0x14] sm:$0xf]
        %v1762 = vld [vmem:[%s832 + $0x18] sm:$0xf]
        %v1763 = vld [vmem:[%s832 + $0x1c] sm:$0xf]
        %v1764 = vld [vmem:[%s835] sm:$0x1]
        %v1766 = vlaneseq
        %v1767 = vshrl.u32 %v1766, 7
        %v1768 = vsub.s32 0, %v1767
        %v1769 = vrot.slane %v1764, %v1768
        %v1779 = vunpack.c.l.b16 %v1756
        %v1780 = vunpack.c.l.b16 %v1757
        %v1781 = vunpack.c.l.b16 %v1758
        %v1782 = vunpack.c.l.b16 %v1759
        %v1783 = vunpack.c.l.b16 %v1760
        %v1784 = vunpack.c.l.b16 %v1761
        %v1785 = vunpack.c.l.b16 %v1762
        %v1786 = vunpack.c.l.b16 %v1763
        %v1787 = vpack.c.b16 %v1780, %v1779
        %v1788 = vpack.c.b16 %v1782, %v1781
        %v1789 = vpack.c.b16 %v1784, %v1783
        %v1790 = vpack.c.b16 %v1786, %v1785
        %vm1795 = vcmask 523264
        %v1797 = vsel %vm1795, %v1755, 0
        %1799 = vmatprep.subr.bf16.mxu0 0
        %1800 = vmatpush1.bf16.msra.mxu0 %v1787
        %1801 = vmatprep.subr.bf16.mxu0 0
        %1802 = vmatpush1.bf16.msra.mxu0 %v1788
        %1803 = vmatprep.subr.bf16.mxu0 0
        %1804 = vmatpush1.bf16.msra.mxu0 %v1789
        %1805 = vmatprep.subr.bf16.mxu0 0
        %1806 = vmatpush1.bf16.msra.mxu0 %v1790
        %1807 = vmatprep.subr.bf16.mxu0 0
        %1808 = vmatpush1.bf16.msra.mxu0 0
        %1809 = vmatprep.subr.bf16.mxu0 0
        %1810 = vmatpush1.bf16.msra.mxu0 0
        %1811 = vmatprep.subr.bf16.mxu0 0
        %1812 = vmatpush1.bf16.msra.mxu0 0
        %1813 = vmatprep.subr.bf16.mxu0 0
        %1814 = vmatpush1.bf16.msra.mxu0 0
        %1815 = vmatprep.subr.bf16.mxu0 0
        %1816 = vmatpush1.bf16.msra.mxu0 0
        %1817 = vmatprep.subr.bf16.mxu0 0
        %1818 = vmatpush1.bf16.msra.mxu0 0
        %1819 = vmatprep.subr.bf16.mxu0 0
        %1820 = vmatpush1.bf16.msra.mxu0 0
        %1821 = vmatprep.subr.bf16.mxu0 0
        %1822 = vmatpush1.bf16.msra.mxu0 0
        %1823 = vmatprep.subr.bf16.mxu0 0
        %1824 = vmatpush1.bf16.msra.mxu0 0
        %1825 = vmatprep.subr.bf16.mxu0 0
        %1826 = vmatpush1.bf16.msra.mxu0 0
        %1827 = vmatprep.subr.bf16.mxu0 0
        %1828 = vmatpush1.bf16.msra.mxu0 0
        %1829 = vmatprep.subr.bf16.mxu0 0
        %1830 = vmatpush1.bf16.msra.mxu0 0
        %1831 = vmatprep.mubr.bf16.mxu0 0
        %1832 = vmatmul.mubr.bf16.gmra.mrb[0].mxu0 %v1797
        %v1833 = vpop.f32.mrb[0].mxu0
        %v1834 = vadd.f32 %v1769, %v1833
        %v1835 = vpop.f32.mrb[0].mxu0
        %v1836 = vpop.f32.mrb[0].mxu0
        %v1837 = vadd.f32 %v1769, %v1836
        %v1838 = vpop.f32.mrb[0].mxu0
        %1839 = vdwg.mxu0
        %v1840 = vadd.f32 %v1667, %v1834
        %v1841 = vadd.f32 %v1668, %v1837
        %v1842 = vld [vmem:[%s838] sm:$0x1]
        %v1843 = vld [vmem:[%s841] sm:$0x1]
        %v1844 = vsel %vm924, %v1840, 0.0
        %1845 = vadd.xlane.f32.xlu0 %v1844
        %v1846 = vpop.xlane.xlu0 %1845
        %v1847 = vsel %vm924, %v1841, 0.0
        %1848 = vadd.xlane.f32.xlu0 %v1847
        %v1849 = vpop.xlane.xlu0 %1848
        %v1850 = vmul.f32 %v1846, %v1632
        %v1851 = vmul.f32 %v1849, %v1632
        %v1852 = vsub.f32 %v1840, %v1850
        %v1853 = vsub.f32 %v1841, %v1851
        %v1854 = vmul.f32 %v1852, %v1852
        %v1855 = vmul.f32 %v1853, %v1853
        %v1856 = vsel %vm924, %v1854, 0.0
        %1857 = vadd.xlane.f32.xlu0 %v1856
        %v1858 = vpop.xlane.xlu0 %1857
        %v1859 = vsel %vm924, %v1855, 0.0
        %1860 = vadd.xlane.f32.xlu0 %v1859
        %v1861 = vpop.xlane.xlu0 %1860
        %v1862 = vmul.f32 %v1858, %v1632
        %v1863 = vmul.f32 %v1861, %v1632
        %v1864 = vadd.f32 %v1862, 1e-12
        %v1865 = vadd.f32 %v1863, 1e-12
        %v1866 = vrsqrt.pop %v1864
        %v1867 = vrsqrt.pop %v1865
        %v1868 = vmul.f32 %v1852, %v1866
        %v1869 = vmul.f32 %v1853, %v1867
        %v1871 = vlaneseq
        %v1872 = vshrl.u32 %v1871, 7
        %v1873 = vsub.s32 0, %v1872
        %v1874 = vrot.slane %v1842, %v1873
        %v1876 = vmul.f32 %v1868, %v1874
        %v1877 = vmul.f32 %v1869, %v1874
        %v1879 = vlaneseq
        %v1880 = vshrl.u32 %v1879, 7
        %v1881 = vsub.s32 0, %v1880
        %v1882 = vrot.slane %v1843, %v1881
        %v1884 = vadd.f32 %v1876, %v1882
        %v1885 = vadd.f32 %v1877, %v1882
        %1886 = vst.msk [vmem:[#allocation2] sm:$0xff] %vm924, %v1884
        %1887 = vst.msk [vmem:[#allocation2 + $0x8] sm:$0xff] %vm924, %v1885
        %p1888 = scmp.eq.s32.totalorder %s34, 1
        // Predicated region
        $region113: #{bert_with_extra_feature.1} parent=107 // pred_check
          %p1889 = pneg %p1888
        $region114: #{bert_with_extra_feature.1} parent=107 // pred_check_branch
          %1891 = sbr.rel (%p1889) target = $region116
        $region115: #{bert_with_extra_feature.1} parent=107 // pred_region
          %v1893 = vrot.slane %v1885, 7
          %vm1895 = vcmask 1040384
          %v1896 = vsel %vm1895, %v1884, %v1893
          %v1897 = vpack.c.bf16 %v1896, %v1896
          %v1898 = vld [vmem:[%s17] sm:$0xf]
          %v1899 = vld [vmem:[%s17 + $0x4] sm:$0xf]
          %v1900 = vld [vmem:[%s17 + $0x8] sm:$0xf]
          %v1901 = vld [vmem:[%s17 + $0xc] sm:$0xf]
          %v1902 = vld [vmem:[%s18] sm:$0x1]
          %v1904 = vlaneseq
          %v1905 = vshrl.u32 %v1904, 7
          %v1906 = vsub.s32 0, %v1905
          %v1907 = vrot.slane %v1902, %v1906
          %v1913 = vunpack.c.l.b16 %v1898
          %v1914 = vunpack.c.l.b16 %v1899
          %v1915 = vunpack.c.l.b16 %v1900
          %v1916 = vunpack.c.l.b16 %v1901
          %v1917 = vpack.c.b16 %v1914, %v1913
          %v1918 = vpack.c.b16 %v1916, %v1915
          %v1922 = vsel %vm924, %v1897, 0
          %1924 = vmatprep.subr.bf16.mxu0 0
          %1925 = vmatpush1.bf16.msra.mxu0 %v1917
          %1926 = vmatprep.subr.bf16.mxu0 0
          %1927 = vmatpush1.bf16.msra.mxu0 %v1918
          %1928 = vmatprep.subr.bf16.mxu0 0
          %1929 = vmatpush1.bf16.msra.mxu0 0
          %1930 = vmatprep.subr.bf16.mxu0 0
          %1931 = vmatpush1.bf16.msra.mxu0 0
          %1932 = vmatprep.subr.bf16.mxu0 0
          %1933 = vmatpush1.bf16.msra.mxu0 0
          %1934 = vmatprep.subr.bf16.mxu0 0
          %1935 = vmatpush1.bf16.msra.mxu0 0
          %1936 = vmatprep.subr.bf16.mxu0 0
          %1937 = vmatpush1.bf16.msra.mxu0 0
          %1938 = vmatprep.subr.bf16.mxu0 0
          %1939 = vmatpush1.bf16.msra.mxu0 0
          %1940 = vmatprep.subr.bf16.mxu0 0
          %1941 = vmatpush1.bf16.msra.mxu0 0
          %1942 = vmatprep.subr.bf16.mxu0 0
          %1943 = vmatpush1.bf16.msra.mxu0 0
          %1944 = vmatprep.subr.bf16.mxu0 0
          %1945 = vmatpush1.bf16.msra.mxu0 0
          %1946 = vmatprep.subr.bf16.mxu0 0
          %1947 = vmatpush1.bf16.msra.mxu0 0
          %1948 = vmatprep.subr.bf16.mxu0 0
          %1949 = vmatpush1.bf16.msra.mxu0 0
          %1950 = vmatprep.subr.bf16.mxu0 0
          %1951 = vmatpush1.bf16.msra.mxu0 0
          %1952 = vmatprep.subr.bf16.mxu0 0
          %1953 = vmatpush1.bf16.msra.mxu0 0
          %1954 = vmatprep.subr.bf16.mxu0 0
          %1955 = vmatpush1.bf16.msra.mxu0 0
          %1956 = vmatprep.mubr.bf16.mxu0 0
          %1957 = vmatmul.mubr.bf16.gmra.mrb[0].mxu0 %v1922
          %v1958 = vpop.f32.mrb[0].mxu0
          %v1959 = vadd.f32 %v1907, %v1958
          %v1960 = vpop.f32.mrb[0].mxu0
          %v1961 = vpop.f32.mrb[0].mxu0
          %v1962 = vpop.f32.mrb[0].mxu0
          %1963 = vdwg.mxu0
          %v1964 = vtanh.pop %v1959
          %v1965 = vpack.c.bf16 %v1964, %v1964
          %v1966 = vld [vmem:[%s19] sm:$0xf]
          %v1967 = vld [vmem:[%s19 + $0x4] sm:$0xf]
          %v1968 = vld [vmem:[%s19 + $0x8] sm:$0xf]
          %v1969 = vld [vmem:[%s19 + $0xc] sm:$0xf]
          %v1970 = vld [vmem:[%s2] sm:$0x3]
          %v1971 = vld [vmem:[%s20] sm:$0x1]
          %1973 = vset.pattern.permute.xlu0 0
          %1974 = vperm.xlu0 %1973, %v1970
          %v1975 = vpop.permute.xlu0 %1974
          %v1978 = vlaneseq
          %v1979 = vshrl.u32 %v1978, 7
          %v1980 = vsub.s32 0, %v1979
          %v1981 = vrot.slane %v1971, %v1980
          %v1983 = vmul.f32 %v1975, %v1981
          %v1988 = vunpack.c.l.b16 %v1966
          %v1989 = vunpack.c.l.b16 %v1967
          %v1990 = vunpack.c.l.b16 %v1968
          %v1991 = vunpack.c.l.b16 %v1969
          %v1992 = vpack.c.b16 %v1989, %v1988
          %v1993 = vpack.c.b16 %v1991, %v1990
          %v1997 = vsel %vm924, %v1965, 0
          %1999 = vmatprep.subr.bf16.mxu0 0
          %2000 = vmatpush1.bf16.msra.mxu0 %v1992
          %2001 = vmatprep.subr.bf16.mxu0 0
          %2002 = vmatpush1.bf16.msra.mxu0 %v1993
          %2003 = vmatprep.subr.bf16.mxu0 0
          %2004 = vmatpush1.bf16.msra.mxu0 0
          %2005 = vmatprep.subr.bf16.mxu0 0
          %2006 = vmatpush1.bf16.msra.mxu0 0
          %2007 = vmatprep.subr.bf16.mxu0 0
          %2008 = vmatpush1.bf16.msra.mxu0 0
          %2009 = vmatprep.subr.bf16.mxu0 0
          %2010 = vmatpush1.bf16.msra.mxu0 0
          %2011 = vmatprep.subr.bf16.mxu0 0
          %2012 = vmatpush1.bf16.msra.mxu0 0
          %2013 = vmatprep.subr.bf16.mxu0 0
          %2014 = vmatpush1.bf16.msra.mxu0 0
          %2015 = vmatprep.subr.bf16.mxu0 0
          %2016 = vmatpush1.bf16.msra.mxu0 0
          %2017 = vmatprep.subr.bf16.mxu0 0
          %2018 = vmatpush1.bf16.msra.mxu0 0
          %2019 = vmatprep.subr.bf16.mxu0 0
          %2020 = vmatpush1.bf16.msra.mxu0 0
          %2021 = vmatprep.subr.bf16.mxu0 0
          %2022 = vmatpush1.bf16.msra.mxu0 0
          %2023 = vmatprep.subr.bf16.mxu0 0
          %2024 = vmatpush1.bf16.msra.mxu0 0
          %2025 = vmatprep.subr.bf16.mxu0 0
          %2026 = vmatpush1.bf16.msra.mxu0 0
          %2027 = vmatprep.subr.bf16.mxu0 0
          %2028 = vmatpush1.bf16.msra.mxu0 0
          %2029 = vmatprep.subr.bf16.mxu0 0
          %2030 = vmatpush1.bf16.msra.mxu0 0
          %2031 = vmatprep.mubr.bf16.mxu0 0
          %2032 = vmatmul.mubr.bf16.gmra.mrb[0].mxu0 %v1997
          %v2033 = vpop.f32.mrb[0].mxu0
          %v2034 = vadd.f32 %v1983, %v2033
          %v2035 = vpop.f32.mrb[0].mxu0
          %v2036 = vpop.f32.mrb[0].mxu0
          %v2037 = vpop.f32.mrb[0].mxu0
          %2038 = vdwg.mxu0
          %v2039 = vld [vmem:[%s21] sm:$0x1]
          %v2041 = vlaneseq
          %v2042 = vshrl.u32 %v2041, 7
          %v2043 = vsub.s32 0, %v2042
          %v2044 = vrot.slane %v2039, %v2043
          %v2046 = vadd.f32 %v2034, %v2044
          %2047 = vst [vmem:[#allocation3] sm:$0x3] %v2046
        $region116: #{bert_with_extra_feature.1} parent=107 // pred_fallthru
          _
        // Predicated region
        $region117: #{bert_with_extra_feature.1} parent=107 // pred_check
          %p2048 = pneg %p569
        $region118: #{bert_with_extra_feature.1} parent=107 // pred_check_branch
          %2050 = sbr.rel (%p2048) target = $region120
        $region119: #{bert_with_extra_feature.1} parent=107 // pred_region
          %s2052 = ssub.s32 32, 32
          %2053 = vsyncadd [#allocation4], %s2052
          %s2055 = sshll.u32 [#allocation3], 4
          %s2056 = int_to_ptr.vmem [resolvable:$true] %s2055
          %2058 = dma.vmem_to_hbm [thread:$0]  %s2056, 32, %s22, [#allocation4]
        $region120: #{bert_with_extra_feature.1} parent=107 // pred_fallthru
          _
        // Predicated region
        $region121: #{bert_with_extra_feature.1} parent=107 // pred_check
          %p2059 = pneg %p569
        $region122: #{bert_with_extra_feature.1} parent=107 // pred_check_branch
          %2061 = sbr.rel (%p2059) target = $region124
        $region123: #{bert_with_extra_feature.1} parent=107 // pred_region
          %2062 = dma.done [#allocation4], 32
        $region124: #{bert_with_extra_feature.1} parent=107 // pred_fallthru
          _
      $region108: #{bert_with_extra_feature.1} parent=5 // pred_fallthru
        _
      %p2063 = scmp.le.s32.totalorder 2, %s29
      // Predicated region
      $region125: #{bert_with_extra_feature.1} parent=5 // pred_check
        %p2064 = pneg %p2063
      $region126: #{bert_with_extra_feature.1} parent=5 // pred_check_branch
        %2066 = sbr.rel (%p2064) target = $region128
      $region127: #{bert_with_extra_feature.1} parent=5 // pred_region
        %s2067 = ssub.s32 %s29, 2
      $region128: #{bert_with_extra_feature.1} parent=5 // pred_fallthru
        _
    $region6: #{bert_with_extra_feature.1} parent=1 // loop_footer
      %s33 = sadd.s32 1, %s29
    $region7: #{bert_with_extra_feature.1} parent=1 // loop_footer_branch
      %28 = sbr.rel target = $region3
    $region8: #{bert_with_extra_feature.1} parent=1 // loop_exit
      _
    %2068 = vsyncpa [#allocation4], 1
    %s2069 = scalar_lea.sflag [#allocation4], 1
    %2070 = vsyncpa %s2069, 1

</llo_original>
